<compile_context>
chip_gen: v7x
topology: tpu7x:2x2x1
jax: 0.10.0
libtpu: 0.0.40
codegen_flags: <defaults>
</compile_context>

<pallas_src>
import functools

import jax
import jax.numpy as jnp
from jax import lax
from jax.experimental import pallas as pl
from jax.experimental.pallas import tpu as pltpu


_LANE = 128


def _round_up(x, m):
    return ((x + m - 1) // m) * m


def _pad2(x, rows, cols):
    return jnp.pad(x, ((0, rows - x.shape[0]), (0, cols - x.shape[1])))


# ----------------------------- Pallas kernel --------------------------------
def _mvae_kernel(
    latent_half,
    # per-batch-tile activations
    vis_ref, aud_ref, eps_v_ref, eps_a_ref,
    # vision encoder (fused mu|logvar head)
    w1v_ref, b1v_ref, wmlv_ref, bmlv_ref,
    # audio encoder (fused mu|logvar head)
    w1a_ref, b1a_ref, wmla_ref, bmla_ref,
    # vision decoder
    wd1v_ref, bd1v_ref, wd2v_ref, bd2v_ref,
    # audio decoder
    wd1a_ref, bd1a_ref, wd2a_ref, bd2a_ref,
    # outputs
    vrec_ref, arec_ref, mulv_ref,
):
    f32 = jnp.float32
    bf16 = jnp.bfloat16
    lp = mulv_ref.shape[1] // 2  # padded latent width (multiple of 128)

    # ---- Encoder_vision: fc -> relu -> fused (mu | logvar) projection ----
    h_v = jnp.maximum(
        jnp.dot(vis_ref[...], w1v_ref[...], preferred_element_type=f32)
        + b1v_ref[...], 0.0)
    ml_v = jnp.dot(h_v.astype(bf16), wmlv_ref[...],
                   preferred_element_type=f32) + bmlv_ref[...]
    mu_v, lv_v = ml_v[:, :lp], ml_v[:, lp:]

    # ---- Encoder_audio: fc -> relu -> fused (mu | logvar) projection ----
    h_a = jnp.maximum(
        jnp.dot(aud_ref[...], w1a_ref[...], preferred_element_type=f32)
        + b1a_ref[...], 0.0)
    ml_a = jnp.dot(h_a.astype(bf16), wmla_ref[...],
                   preferred_element_type=f32) + bmla_ref[...]
    mu_a, lv_a = ml_a[:, :lp], ml_a[:, lp:]

    # ---- mixture_2experts: cols [0, latent//2) from vision, rest from audio ----
    col = lax.broadcasted_iota(jnp.int32, mu_v.shape, 1)
    take_v = col < latent_half
    mulv_ref[:, :lp] = jnp.where(take_v, mu_v, mu_a)   # mu   (128-aligned store)
    mulv_ref[:, lp:] = jnp.where(take_v, lv_v, lv_a)   # logvar

    # ---- reparameterize per modality (training mode) in f32 ----
    z_v = eps_v_ref[...] * jnp.exp(0.5 * lv_v) + mu_v
    z_a = eps_a_ref[...] * jnp.exp(0.5 * lv_a) + mu_a

    # ---- Decoder_vision: fc -> relu -> fc -> sigmoid ----
    hd_v = jnp.maximum(
        jnp.dot(z_v.astype(bf16), wd1v_ref[...], preferred_element_type=f32)
        + bd1v_ref[...], 0.0)
    vrec_ref[...] = jax.nn.sigmoid(
        jnp.dot(hd_v.astype(bf16), wd2v_ref[...], preferred_element_type=f32)
        + bd2v_ref[...])

    # ---- Decoder_audio: fc -> relu -> fc -> sigmoid ----
    hd_a = jnp.maximum(
        jnp.dot(z_a.astype(bf16), wd1a_ref[...], preferred_element_type=f32)
        + bd1a_ref[...], 0.0)
    arec_ref[...] = jax.nn.sigmoid(
        jnp.dot(hd_a.astype(bf16), wd2a_ref[...], preferred_element_type=f32)
        + bd2a_ref[...])


# ------------------------------ param packing --------------------------------
def _pack_params(params, vis_dim, audio_dim, hidden, latent_dim):
    """Pad to multiples of 128, fuse mu/logvar heads, cast weights to bf16."""
    bf16 = jnp.bfloat16
    vd = _round_up(vis_dim, _LANE)
    ad = _round_up(audio_dim, _LANE)
    hp = _round_up(hidden, _LANE)
    lp = _round_up(latent_dim, _LANE)
    p = params

    def wpad(x, r, c):
        return _pad2(x, r, c).astype(bf16)

    def bpad(x, c):
        return _pad2(x, 1, c).astype(jnp.float32)

    wmlv = jnp.concatenate([_pad2(p["wmuv"], hp, lp), _pad2(p["wlvv"], hp, lp)],
                           axis=1).astype(bf16)
    bmlv = jnp.concatenate([_pad2(p["bmuv"], 1, lp), _pad2(p["blvv"], 1, lp)],
                           axis=1).astype(jnp.float32)
    wmla = jnp.concatenate([_pad2(p["wmua"], hp, lp), _pad2(p["wlva"], hp, lp)],
                           axis=1).astype(bf16)
    bmla = jnp.concatenate([_pad2(p["bmua"], 1, lp), _pad2(p["blva"], 1, lp)],
                           axis=1).astype(jnp.float32)

    return [
        wpad(p["w1v"], vd, hp), bpad(p["b1v"], hp), wmlv, bmlv,
        wpad(p["w1a"], ad, hp), bpad(p["b1a"], hp), wmla, bmla,
        wpad(p["wd1v"], lp, hp), bpad(p["bd1v"], hp),
        wpad(p["wd2v"], hp, vd), bpad(p["bd2v"], vd),
        wpad(p["wd1a"], lp, hp), bpad(p["bd1a"], hp),
        wpad(p["wd2a"], hp, ad), bpad(p["bd2a"], ad),
    ]


# ------------------------------ JAX wrapper ----------------------------------
@functools.partial(jax.jit, static_argnames=("latent_dim", "block_b"))
def multivae_forward(vision, audio, eps_v, eps_a, params, latent_dim, block_b=8):
    """vision: (B, C, H, W) NCHW; audio: (B, A). Returns (vision_recon, audio_recon, mu, logvar)."""
    B, C, H, W = vision.shape
    vis_dim = C * H * W
    A = audio.shape[1]
    hidden = params["w1v"].shape[1]

    vd = _round_up(vis_dim, _LANE)
    ad = _round_up(A, _LANE)
    lp = _round_up(latent_dim, _LANE)
    n_tiles = pl.cdiv(B, block_b)
    bp = n_tiles * block_b

    bf16 = jnp.bfloat16
    vis_flat = vision.reshape(B, vis_dim).astype(bf16)   # row-major == torch .view(B, -1)
    vis_p = jnp.pad(vis_flat, ((0, bp - B), (0, vd - vis_dim)))
    aud_p = jnp.pad(audio.astype(bf16), ((0, bp - B), (0, ad - A)))
    eps_v_p = jnp.pad(eps_v.astype(jnp.float32), ((0, bp - B), (0, lp - latent_dim)))
    eps_a_p = jnp.pad(eps_a.astype(jnp.float32), ((0, bp - B), (0, lp - latent_dim)))

    packed = _pack_params(params, vis_dim, A, hidden, latent_dim)

    def act_spec(dim):
        # batch-tiled: new block per grid step -> double-buffered pipeline
        return pl.BlockSpec((block_b, dim), lambda i: (i, 0))

    def resident_spec(shape):
        # same block every step -> weight stays resident in VMEM
        return pl.BlockSpec(shape, lambda i: (0, 0))

    in_specs = ([act_spec(vd), act_spec(ad), act_spec(lp), act_spec(lp)]
                + [resident_spec(w.shape) for w in packed])
    out_shapes = (
        jax.ShapeDtypeStruct((bp, vd), jnp.float32),        # vision recon (flat, padded)
        jax.ShapeDtypeStruct((bp, ad), jnp.float32),        # audio recon (padded)
        jax.ShapeDtypeStruct((bp, 2 * lp), jnp.float32),    # packed [mu | logvar]
    )
    out_specs = (act_spec(vd), act_spec(ad), act_spec(2 * lp))

    vrec_p, arec_p, mulv_p = pl.pallas_call(
        functools.partial(_mvae_kernel, latent_dim // 2),
        out_shape=out_shapes,
        grid=(n_tiles,),
        in_specs=in_specs,
        out_specs=out_specs,
        compiler_params=pltpu.CompilerParams(
            dimension_semantics=("parallel",)),
    )(vis_p, aud_p, eps_v_p, eps_a_p, *packed)

    vision_recon = vrec_p[:B, :vis_dim].reshape(B, C, H, W)
    audio_recon = arec_p[:B, :A]
    mu = mulv_p[:B, :latent_dim]
    logvar = mulv_p[:B, lp:lp + latent_dim]
    return vision_recon, audio_recon, mu, logvar


# ------------------------------ params setup ---------------------------------
_PARAM_ORDER = [
    "w1v", "b1v", "wmuv", "bmuv", "wlvv", "blvv",
    "w1a", "b1a", "wmua", "bmua", "wlva", "blva",
    "wd1v", "bd1v", "wd2v", "bd2v",
    "wd1a", "bd1a", "wd2a", "bd2a",
]


def init_params(key, vis_dim, audio_dim, hidden, latent_dim):
    shapes = {
        # vision encoder
        "w1v": (vis_dim, hidden), "b1v": (1, hidden),
        "wmuv": (hidden, latent_dim), "bmuv": (1, latent_dim),
        "wlvv": (hidden, latent_dim), "blvv": (1, latent_dim),
        # audio encoder
        "w1a": (audio_dim, hidden), "b1a": (1, hidden),
        "wmua": (hidden, latent_dim), "bmua": (1, latent_dim),
        "wlva": (hidden, latent_dim), "blva": (1, latent_dim),
        # vision decoder
        "wd1v": (latent_dim, hidden), "bd1v": (1, hidden),
        "wd2v": (hidden, vis_dim), "bd2v": (1, vis_dim),
        # audio decoder
        "wd1a": (latent_dim, hidden), "bd1a": (1, hidden),
        "wd2a": (hidden, audio_dim), "bd2a": (1, audio_dim),
    }
    params = {}
    keys = jax.random.split(key, len(_PARAM_ORDER))
    for k, name in zip(keys, _PARAM_ORDER):
        params[name] = (0.05 * jax.random.normal(k, shapes[name])).astype(jnp.float32)
    return params


# ------------------------------ pure-JAX reference ----------------------------
def _reference_forward(vision, audio, eps_v, eps_a, params, latent_dim):
    """Plain-JAX reference with identical bf16-matmul / f32-elementwise math."""
    bf16, f32 = jnp.bfloat16, jnp.float32
    B = vision.shape[0]
    p = params
    w = lambda name: p[name].astype(bf16)

    x_v = vision.reshape(B, -1).astype(bf16)
    x_a = audio.astype(bf16)

    h_v = jnp.maximum(jnp.dot(x_v, w("w1v"), preferred_element_type=f32) + p["b1v"], 0.0)
    mu_v = jnp.dot(h_v.astype(bf16), w("wmuv"), preferred_element_type=f32) + p["bmuv"]
    lv_v = jnp.dot(h_v.astype(bf16), w("wlvv"), preferred_element_type=f32) + p["blvv"]

    h_a = jnp.maximum(jnp.dot(x_a, w("w1a"), preferred_element_type=f32) + p["b1a"], 0.0)
    mu_a = jnp.dot(h_a.astype(bf16), w("wmua"), preferred_element_type=f32) + p["bmua"]
    lv_a = jnp.dot(h_a.astype(bf16), w("wlva"), preferred_element_type=f32) + p["blva"]

    half = latent_dim // 2
    mu = jnp.concatenate([mu_v[:, :half], mu_a[:, half:]], axis=1)
    logvar = jnp.concatenate([lv_v[:, :half], lv_a[:, half:]], axis=1)

    z_v = eps_v * jnp.exp(0.5 * lv_v) + mu_v
    z_a = eps_a * jnp.exp(0.5 * lv_a) + mu_a

    hd_v = jnp.maximum(
        jnp.dot(z_v.astype(bf16), w("wd1v"), preferred_element_type=f32) + p["bd1v"], 0.0)
    vrec = jax.nn.sigmoid(
        jnp.dot(hd_v.astype(bf16), w("wd2v"), preferred_element_type=f32) + p["bd2v"])
    hd_a = jnp.maximum(
        jnp.dot(z_a.astype(bf16), w("wd1a"), preferred_element_type=f32) + p["bd1a"], 0.0)
    arec = jax.nn.sigmoid(
        jnp.dot(hd_a.astype(bf16), w("wd2a"), preferred_element_type=f32) + p["bd2a"])
    return vrec, arec, mu, logvar


# --------------------------------- main ---------------------------------------
if __name__ == "__main__":
    B, C, H, W = 16, 4, 16, 16      # vis_dim = 1024
    AUDIO_DIM = 128
    HIDDEN = 64
    LATENT = 32

    root = jax.random.PRNGKey(0)
    k_vis, k_aud, k_ev, k_ea, k_par = jax.random.split(root, 5)

    vision = jax.random.uniform(k_vis, (B, C, H, W), dtype=jnp.float32)   # NCHW
    audio = jax.random.uniform(k_aud, (B, AUDIO_DIM), dtype=jnp.float32)
    eps_v = jax.random.normal(k_ev, (B, LATENT), dtype=jnp.float32)
    eps_a = jax.random.normal(k_ea, (B, LATENT), dtype=jnp.float32)

    params = init_params(k_par, C * H * W, AUDIO_DIM, HIDDEN, LATENT)

    vision_recon, audio_recon, mu, logvar = multivae_forward(
        vision, audio, eps_v, eps_a, params, latent_dim=LATENT, block_b=8)
    jax.block_until_ready((vision_recon, audio_recon, mu, logvar))

    # shape / sanity checks
    assert vision_recon.shape == (B, C, H, W)
    assert audio_recon.shape == (B, AUDIO_DIM)
    assert mu.shape == (B, LATENT) and logvar.shape == (B, LATENT)
    for t in (vision_recon, audio_recon, mu, logvar):
        assert bool(jnp.all(jnp.isfinite(t)))

    # numerical check vs. plain-JAX reference using the same mixed-precision math
    vrec_ref, arec_ref, mu_ref, lv_ref = _reference_forward(
        vision, audio, eps_v, eps_a, params, LATENT)

    def _close(a, b, tol=5e-3):
        return bool(jnp.max(jnp.abs(a - b)) < tol)

    assert _close(vision_recon.reshape(B, -1), vrec_ref)
    assert _close(audio_recon, arec_ref)
    assert _close(mu, mu_ref)
    assert _close(logvar, lv_ref)

    print("KERNEL_OK")
</pallas_src>

<mosaic_0001>
module attributes {stable_mosaic.version = 11 : i64} {
  func.func @_mvae_kernel(%arg0: i32, %arg1: memref<8x1024xbf16, #tpu.memory_space<vmem>>, %arg2: memref<8x128xbf16, #tpu.memory_space<vmem>>, %arg3: memref<8x128xf32, #tpu.memory_space<vmem>>, %arg4: memref<8x128xf32, #tpu.memory_space<vmem>>, %arg5: memref<1024x128xbf16, #tpu.memory_space<vmem>>, %arg6: memref<1x128xf32, #tpu.memory_space<vmem>>, %arg7: memref<128x256xbf16, #tpu.memory_space<vmem>>, %arg8: memref<1x256xf32, #tpu.memory_space<vmem>>, %arg9: memref<128x128xbf16, #tpu.memory_space<vmem>>, %arg10: memref<1x128xf32, #tpu.memory_space<vmem>>, %arg11: memref<128x256xbf16, #tpu.memory_space<vmem>>, %arg12: memref<1x256xf32, #tpu.memory_space<vmem>>, %arg13: memref<128x128xbf16, #tpu.memory_space<vmem>>, %arg14: memref<1x128xf32, #tpu.memory_space<vmem>>, %arg15: memref<128x1024xbf16, #tpu.memory_space<vmem>>, %arg16: memref<1x1024xf32, #tpu.memory_space<vmem>>, %arg17: memref<128x128xbf16, #tpu.memory_space<vmem>>, %arg18: memref<1x128xf32, #tpu.memory_space<vmem>>, %arg19: memref<128x128xbf16, #tpu.memory_space<vmem>>, %arg20: memref<1x128xf32, #tpu.memory_space<vmem>>, %arg21: memref<8x1024xf32, #tpu.memory_space<vmem>>, %arg22: memref<8x128xf32, #tpu.memory_space<vmem>>, %arg23: memref<8x256xf32, #tpu.memory_space<vmem>>) attributes {dimension_semantics = [#tpu.dimension_semantics<parallel>], iteration_bounds = array<i64: 2>, scalar_prefetch = 0 : i64, scratch_operands = 0 : i64, tpu.core_type = #tpu.core_type<tc>, window_params = [{transform_indices = @transform_0, window_bounds = array<i64: 8, 1024>}, {transform_indices = @transform_1, window_bounds = array<i64: 8, 128>}, {transform_indices = @transform_2, window_bounds = array<i64: 8, 128>}, {transform_indices = @transform_3, window_bounds = array<i64: 8, 128>}, {pipeline_mode = #tpu.pipeline_mode<synchronous>, transform_indices = @transform_4, window_bounds = array<i64: 1024, 128>}, {pipeline_mode = #tpu.pipeline_mode<synchronous>, transform_indices = @transform_5, window_bounds = array<i64: 1, 128>}, {pipeline_mode = #tpu.pipeline_mode<synchronous>, transform_indices = @transform_6, window_bounds = array<i64: 128, 256>}, {pipeline_mode = #tpu.pipeline_mode<synchronous>, transform_indices = @transform_7, window_bounds = array<i64: 1, 256>}, {pipeline_mode = #tpu.pipeline_mode<synchronous>, transform_indices = @transform_8, window_bounds = array<i64: 128, 128>}, {pipeline_mode = #tpu.pipeline_mode<synchronous>, transform_indices = @transform_9, window_bounds = array<i64: 1, 128>}, {pipeline_mode = #tpu.pipeline_mode<synchronous>, transform_indices = @transform_10, window_bounds = array<i64: 128, 256>}, {pipeline_mode = #tpu.pipeline_mode<synchronous>, transform_indices = @transform_11, window_bounds = array<i64: 1, 256>}, {pipeline_mode = #tpu.pipeline_mode<synchronous>, transform_indices = @transform_12, window_bounds = array<i64: 128, 128>}, {pipeline_mode = #tpu.pipeline_mode<synchronous>, transform_indices = @transform_13, window_bounds = array<i64: 1, 128>}, {pipeline_mode = #tpu.pipeline_mode<synchronous>, transform_indices = @transform_14, window_bounds = array<i64: 128, 1024>}, {pipeline_mode = #tpu.pipeline_mode<synchronous>, transform_indices = @transform_15, window_bounds = array<i64: 1, 1024>}, {pipeline_mode = #tpu.pipeline_mode<synchronous>, transform_indices = @transform_16, window_bounds = array<i64: 128, 128>}, {pipeline_mode = #tpu.pipeline_mode<synchronous>, transform_indices = @transform_17, window_bounds = array<i64: 1, 128>}, {pipeline_mode = #tpu.pipeline_mode<synchronous>, transform_indices = @transform_18, window_bounds = array<i64: 128, 128>}, {pipeline_mode = #tpu.pipeline_mode<synchronous>, transform_indices = @transform_19, window_bounds = array<i64: 1, 128>}, {transform_indices = @transform_20, window_bounds = array<i64: 8, 1024>}, {transform_indices = @transform_21, window_bounds = array<i64: 8, 128>}, {transform_indices = @transform_22, window_bounds = array<i64: 8, 256>}]} {
    %c0 = arith.constant 0 : index
    %c0_0 = arith.constant 0 : index
    %0 = vector.load %arg1[%c0, %c0_0] : memref<8x1024xbf16, #tpu.memory_space<vmem>>, vector<8x1024xbf16>
    %c0_1 = arith.constant 0 : index
    %c0_2 = arith.constant 0 : index
    %1 = vector.load %arg5[%c0_1, %c0_2] : memref<1024x128xbf16, #tpu.memory_space<vmem>>, vector<1024x128xbf16>
    %cst = arith.constant dense<0.000000e+00> : vector<8x128xf32>
    %2 = tpu.matmul %0, %1, %cst {dimension_numbers = #tpu.dot_dimension_numbers<[1], [0], [0], [1], [0, 0, 1, 1], [], []>} : vector<8x1024xbf16>, vector<1024x128xbf16>, vector<8x128xf32> -> vector<8x128xf32>
    %c0_3 = arith.constant 0 : index
    %c0_4 = arith.constant 0 : index
    %3 = vector.load %arg6[%c0_3, %c0_4] : memref<1x128xf32, #tpu.memory_space<vmem>>, vector<1x128xf32>
    %4 = vector.broadcast %3 : vector<1x128xf32> to vector<8x128xf32>
    %5 = arith.addf %2, %4 : vector<8x128xf32>
    %cst_5 = arith.constant 0.000000e+00 : f32
    %6 = vector.broadcast %cst_5 : f32 to vector<8x128xf32>
    %7 = arith.maximumf %5, %6 : vector<8x128xf32>
    %8 = arith.truncf %7 : vector<8x128xf32> to vector<8x128xbf16>
    %c0_6 = arith.constant 0 : index
    %c0_7 = arith.constant 0 : index
    %9 = vector.load %arg7[%c0_6, %c0_7] : memref<128x256xbf16, #tpu.memory_space<vmem>>, vector<128x256xbf16>
    %cst_8 = arith.constant dense<0.000000e+00> : vector<8x256xf32>
    %10 = tpu.matmul %8, %9, %cst_8 {dimension_numbers = #tpu.dot_dimension_numbers<[1], [0], [0], [1], [0, 0, 1, 1], [], []>} : vector<8x128xbf16>, vector<128x256xbf16>, vector<8x256xf32> -> vector<8x256xf32>
    %c0_9 = arith.constant 0 : index
    %c0_10 = arith.constant 0 : index
    %11 = vector.load %arg8[%c0_9, %c0_10] : memref<1x256xf32, #tpu.memory_space<vmem>>, vector<1x256xf32>
    %12 = vector.broadcast %11 : vector<1x256xf32> to vector<8x256xf32>
    %13 = arith.addf %10, %12 : vector<8x256xf32>
    %14 = vector.extract_strided_slice %13 {offsets = [0, 0], sizes = [8, 128], strides = [1, 1]} : vector<8x256xf32> to vector<8x128xf32>
    %15 = vector.extract_strided_slice %13 {offsets = [0, 128], sizes = [8, 128], strides = [1, 1]} : vector<8x256xf32> to vector<8x128xf32>
    %c0_11 = arith.constant 0 : index
    %c0_12 = arith.constant 0 : index
    %16 = vector.load %arg2[%c0_11, %c0_12] : memref<8x128xbf16, #tpu.memory_space<vmem>>, vector<8x128xbf16>
    %c0_13 = arith.constant 0 : index
    %c0_14 = arith.constant 0 : index
    %17 = vector.load %arg9[%c0_13, %c0_14] : memref<128x128xbf16, #tpu.memory_space<vmem>>, vector<128x128xbf16>
    %cst_15 = arith.constant dense<0.000000e+00> : vector<8x128xf32>
    %18 = tpu.matmul %16, %17, %cst_15 {dimension_numbers = #tpu.dot_dimension_numbers<[1], [0], [0], [1], [0, 0, 1, 1], [], []>} : vector<8x128xbf16>, vector<128x128xbf16>, vector<8x128xf32> -> vector<8x128xf32>
    %c0_16 = arith.constant 0 : index
    %c0_17 = arith.constant 0 : index
    %19 = vector.load %arg10[%c0_16, %c0_17] : memref<1x128xf32, #tpu.memory_space<vmem>>, vector<1x128xf32>
    %20 = vector.broadcast %19 : vector<1x128xf32> to vector<8x128xf32>
    %21 = arith.addf %18, %20 : vector<8x128xf32>
    %cst_18 = arith.constant 0.000000e+00 : f32
    %22 = vector.broadcast %cst_18 : f32 to vector<8x128xf32>
    %23 = arith.maximumf %21, %22 : vector<8x128xf32>
    %24 = arith.truncf %23 : vector<8x128xf32> to vector<8x128xbf16>
    %c0_19 = arith.constant 0 : index
    %c0_20 = arith.constant 0 : index
    %25 = vector.load %arg11[%c0_19, %c0_20] : memref<128x256xbf16, #tpu.memory_space<vmem>>, vector<128x256xbf16>
    %cst_21 = arith.constant dense<0.000000e+00> : vector<8x256xf32>
    %26 = tpu.matmul %24, %25, %cst_21 {dimension_numbers = #tpu.dot_dimension_numbers<[1], [0], [0], [1], [0, 0, 1, 1], [], []>} : vector<8x128xbf16>, vector<128x256xbf16>, vector<8x256xf32> -> vector<8x256xf32>
    %c0_22 = arith.constant 0 : index
    %c0_23 = arith.constant 0 : index
    %27 = vector.load %arg12[%c0_22, %c0_23] : memref<1x256xf32, #tpu.memory_space<vmem>>, vector<1x256xf32>
    %28 = vector.broadcast %27 : vector<1x256xf32> to vector<8x256xf32>
    %29 = arith.addf %26, %28 : vector<8x256xf32>
    %30 = vector.extract_strided_slice %29 {offsets = [0, 0], sizes = [8, 128], strides = [1, 1]} : vector<8x256xf32> to vector<8x128xf32>
    %31 = vector.extract_strided_slice %29 {offsets = [0, 128], sizes = [8, 128], strides = [1, 1]} : vector<8x256xf32> to vector<8x128xf32>
    %32 = tpu.iota {dimensions = array<i32: 1>} : vector<8x128xi32>
    %c16_i32 = arith.constant 16 : i32
    %33 = vector.broadcast %c16_i32 : i32 to vector<8x128xi32>
    %34 = arith.cmpi slt, %32, %33 : vector<8x128xi32>
    %35 = arith.select %34, %14, %30 : vector<8x128xi1>, vector<8x128xf32>
    %c0_24 = arith.constant 0 : index
    %c0_25 = arith.constant 0 : index
    %36 = vector.load %arg23[%c0_24, %c0_25] : memref<8x256xf32, #tpu.memory_space<vmem>>, vector<8x128xf32>
    tpu.vector_store %arg23[%c0_24, %c0_25], %35 {strides = array<i32>} : memref<8x256xf32, #tpu.memory_space<vmem>>, vector<8x128xf32>,
    %37 = arith.select %34, %15, %31 : vector<8x128xi1>, vector<8x128xf32>
    %c0_26 = arith.constant 0 : index
    %c128 = arith.constant 128 : index
    %38 = vector.load %arg23[%c0_26, %c128] : memref<8x256xf32, #tpu.memory_space<vmem>>, vector<8x128xf32>
    tpu.vector_store %arg23[%c0_26, %c128], %37 {strides = array<i32>} : memref<8x256xf32, #tpu.memory_space<vmem>>, vector<8x128xf32>,
    %c0_27 = arith.constant 0 : index
    %c0_28 = arith.constant 0 : index
    %39 = vector.load %arg3[%c0_27, %c0_28] : memref<8x128xf32, #tpu.memory_space<vmem>>, vector<8x128xf32>
    %cst_29 = arith.constant 5.000000e-01 : f32
    %40 = vector.broadcast %cst_29 : f32 to vector<8x128xf32>
    %41 = arith.mulf %40, %15 : vector<8x128xf32>
    %42 = math.exp %41 : vector<8x128xf32>
    %43 = arith.mulf %39, %42 : vector<8x128xf32>
    %44 = arith.addf %43, %14 : vector<8x128xf32>
    %c0_30 = arith.constant 0 : index
    %c0_31 = arith.constant 0 : index
    %45 = vector.load %arg4[%c0_30, %c0_31] : memref<8x128xf32, #tpu.memory_space<vmem>>, vector<8x128xf32>
    %cst_32 = arith.constant 5.000000e-01 : f32
    %46 = vector.broadcast %cst_32 : f32 to vector<8x128xf32>
    %47 = arith.mulf %46, %31 : vector<8x128xf32>
    %48 = math.exp %47 : vector<8x128xf32>
    %49 = arith.mulf %45, %48 : vector<8x128xf32>
    %50 = arith.addf %49, %30 : vector<8x128xf32>
    %51 = arith.truncf %44 : vector<8x128xf32> to vector<8x128xbf16>
    %c0_33 = arith.constant 0 : index
    %c0_34 = arith.constant 0 : index
    %52 = vector.load %arg13[%c0_33, %c0_34] : memref<128x128xbf16, #tpu.memory_space<vmem>>, vector<128x128xbf16>
    %cst_35 = arith.constant dense<0.000000e+00> : vector<8x128xf32>
    %53 = tpu.matmul %51, %52, %cst_35 {dimension_numbers = #tpu.dot_dimension_numbers<[1], [0], [0], [1], [0, 0, 1, 1], [], []>} : vector<8x128xbf16>, vector<128x128xbf16>, vector<8x128xf32> -> vector<8x128xf32>
    %c0_36 = arith.constant 0 : index
    %c0_37 = arith.constant 0 : index
    %54 = vector.load %arg14[%c0_36, %c0_37] : memref<1x128xf32, #tpu.memory_space<vmem>>, vector<1x128xf32>
    %55 = vector.broadcast %54 : vector<1x128xf32> to vector<8x128xf32>
    %56 = arith.addf %53, %55 : vector<8x128xf32>
    %cst_38 = arith.constant 0.000000e+00 : f32
    %57 = vector.broadcast %cst_38 : f32 to vector<8x128xf32>
    %58 = arith.maximumf %56, %57 : vector<8x128xf32>
    %59 = arith.truncf %58 : vector<8x128xf32> to vector<8x128xbf16>
    %c0_39 = arith.constant 0 : index
    %c0_40 = arith.constant 0 : index
    %60 = vector.load %arg15[%c0_39, %c0_40] : memref<128x1024xbf16, #tpu.memory_space<vmem>>, vector<128x1024xbf16>
    %cst_41 = arith.constant dense<0.000000e+00> : vector<8x1024xf32>
    %61 = tpu.matmul %59, %60, %cst_41 {dimension_numbers = #tpu.dot_dimension_numbers<[1], [0], [0], [1], [0, 0, 1, 1], [], []>} : vector<8x128xbf16>, vector<128x1024xbf16>, vector<8x1024xf32> -> vector<8x1024xf32>
    %c0_42 = arith.constant 0 : index
    %c0_43 = arith.constant 0 : index
    %62 = vector.load %arg16[%c0_42, %c0_43] : memref<1x1024xf32, #tpu.memory_space<vmem>>, vector<1x1024xf32>
    %63 = vector.broadcast %62 : vector<1x1024xf32> to vector<8x1024xf32>
    %64 = arith.addf %61, %63 : vector<8x1024xf32>
    %65 = arith.negf %64 : vector<8x1024xf32>
    %66 = math.exp %65 : vector<8x1024xf32>
    %cst_44 = arith.constant 1.000000e+00 : f32
    %67 = vector.broadcast %cst_44 : f32 to vector<8x1024xf32>
    %68 = arith.addf %67, %66 : vector<8x1024xf32>
    %69 = arith.divf %67, %68 : vector<8x1024xf32>
    %c0_45 = arith.constant 0 : index
    %c0_46 = arith.constant 0 : index
    %70 = vector.load %arg21[%c0_45, %c0_46] : memref<8x1024xf32, #tpu.memory_space<vmem>>, vector<8x1024xf32>
    tpu.vector_store %arg21[%c0_45, %c0_46], %69 {strides = array<i32>} : memref<8x1024xf32, #tpu.memory_space<vmem>>, vector<8x1024xf32>,
    %71 = arith.truncf %50 : vector<8x128xf32> to vector<8x128xbf16>
    %c0_47 = arith.constant 0 : index
    %c0_48 = arith.constant 0 : index
    %72 = vector.load %arg17[%c0_47, %c0_48] : memref<128x128xbf16, #tpu.memory_space<vmem>>, vector<128x128xbf16>
    %cst_49 = arith.constant dense<0.000000e+00> : vector<8x128xf32>
    %73 = tpu.matmul %71, %72, %cst_49 {dimension_numbers = #tpu.dot_dimension_numbers<[1], [0], [0], [1], [0, 0, 1, 1], [], []>} : vector<8x128xbf16>, vector<128x128xbf16>, vector<8x128xf32> -> vector<8x128xf32>
    %c0_50 = arith.constant 0 : index
    %c0_51 = arith.constant 0 : index
    %74 = vector.load %arg18[%c0_50, %c0_51] : memref<1x128xf32, #tpu.memory_space<vmem>>, vector<1x128xf32>
    %75 = vector.broadcast %74 : vector<1x128xf32> to vector<8x128xf32>
    %76 = arith.addf %73, %75 : vector<8x128xf32>
    %cst_52 = arith.constant 0.000000e+00 : f32
    %77 = vector.broadcast %cst_52 : f32 to vector<8x128xf32>
    %78 = arith.maximumf %76, %77 : vector<8x128xf32>
    %79 = arith.truncf %78 : vector<8x128xf32> to vector<8x128xbf16>
    %c0_53 = arith.constant 0 : index
    %c0_54 = arith.constant 0 : index
    %80 = vector.load %arg19[%c0_53, %c0_54] : memref<128x128xbf16, #tpu.memory_space<vmem>>, vector<128x128xbf16>
    %cst_55 = arith.constant dense<0.000000e+00> : vector<8x128xf32>
    %81 = tpu.matmul %79, %80, %cst_55 {dimension_numbers = #tpu.dot_dimension_numbers<[1], [0], [0], [1], [0, 0, 1, 1], [], []>} : vector<8x128xbf16>, vector<128x128xbf16>, vector<8x128xf32> -> vector<8x128xf32>
    %c0_56 = arith.constant 0 : index
    %c0_57 = arith.constant 0 : index
    %82 = vector.load %arg20[%c0_56, %c0_57] : memref<1x128xf32, #tpu.memory_space<vmem>>, vector<1x128xf32>
    %83 = vector.broadcast %82 : vector<1x128xf32> to vector<8x128xf32>
    %84 = arith.addf %81, %83 : vector<8x128xf32>
    %85 = arith.negf %84 : vector<8x128xf32>
    %86 = math.exp %85 : vector<8x128xf32>
    %cst_58 = arith.constant 1.000000e+00 : f32
    %87 = vector.broadcast %cst_58 : f32 to vector<8x128xf32>
    %88 = arith.addf %87, %86 : vector<8x128xf32>
    %89 = arith.divf %87, %88 : vector<8x128xf32>
    %c0_59 = arith.constant 0 : index
    %c0_60 = arith.constant 0 : index
    %90 = vector.load %arg22[%c0_59, %c0_60] : memref<8x128xf32, #tpu.memory_space<vmem>>, vector<8x128xf32>
    tpu.vector_store %arg22[%c0_59, %c0_60], %89 {strides = array<i32>} : memref<8x128xf32, #tpu.memory_space<vmem>>, vector<8x128xf32>,
    return
  }
  func.func @transform_0(%arg0: i32) -> (i32, i32) {
    %c0_i32 = arith.constant 0 : i32
    %c0_i32_0 = arith.constant 0 : i32
    return %arg0, %c0_i32 : i32, i32
  }
  func.func @transform_1(%arg0: i32) -> (i32, i32) {
    %c0_i32 = arith.constant 0 : i32
    %c0_i32_0 = arith.constant 0 : i32
    return %arg0, %c0_i32 : i32, i32
  }
  func.func @transform_2(%arg0: i32) -> (i32, i32) {
    %c0_i32 = arith.constant 0 : i32
    %c0_i32_0 = arith.constant 0 : i32
    return %arg0, %c0_i32 : i32, i32
  }
  func.func @transform_3(%arg0: i32) -> (i32, i32) {
    %c0_i32 = arith.constant 0 : i32
    %c0_i32_0 = arith.constant 0 : i32
    return %arg0, %c0_i32 : i32, i32
  }
  func.func @transform_4(%arg0: i32) -> (i32, i32) {
    %c0_i32 = arith.constant 0 : i32
    %c0_i32_0 = arith.constant 0 : i32
    %c0_i32_1 = arith.constant 0 : i32
    return %c0_i32, %c0_i32_0 : i32, i32
  }
  func.func @transform_5(%arg0: i32) -> (i32, i32) {
    %c0_i32 = arith.constant 0 : i32
    %c0_i32_0 = arith.constant 0 : i32
    %c0_i32_1 = arith.constant 0 : i32
    return %c0_i32, %c0_i32_0 : i32, i32
  }
  func.func @transform_6(%arg0: i32) -> (i32, i32) {
    %c0_i32 = arith.constant 0 : i32
    %c0_i32_0 = arith.constant 0 : i32
    %c0_i32_1 = arith.constant 0 : i32
    return %c0_i32, %c0_i32_0 : i32, i32
  }
  func.func @transform_7(%arg0: i32) -> (i32, i32) {
    %c0_i32 = arith.constant 0 : i32
    %c0_i32_0 = arith.constant 0 : i32
    %c0_i32_1 = arith.constant 0 : i32
    return %c0_i32, %c0_i32_0 : i32, i32
  }
  func.func @transform_8(%arg0: i32) -> (i32, i32) {
    %c0_i32 = arith.constant 0 : i32
    %c0_i32_0 = arith.constant 0 : i32
    %c0_i32_1 = arith.constant 0 : i32
    return %c0_i32, %c0_i32_0 : i32, i32
  }
  func.func @transform_9(%arg0: i32) -> (i32, i32) {
    %c0_i32 = arith.constant 0 : i32
    %c0_i32_0 = arith.constant 0 : i32
    %c0_i32_1 = arith.constant 0 : i32
    return %c0_i32, %c0_i32_0 : i32, i32
  }
  func.func @transform_10(%arg0: i32) -> (i32, i32) {
    %c0_i32 = arith.constant 0 : i32
    %c0_i32_0 = arith.constant 0 : i32
    %c0_i32_1 = arith.constant 0 : i32
    return %c0_i32, %c0_i32_0 : i32, i32
  }
  func.func @transform_11(%arg0: i32) -> (i32, i32) {
    %c0_i32 = arith.constant 0 : i32
    %c0_i32_0 = arith.constant 0 : i32
    %c0_i32_1 = arith.constant 0 : i32
    return %c0_i32, %c0_i32_0 : i32, i32
  }
  func.func @transform_12(%arg0: i32) -> (i32, i32) {
    %c0_i32 = arith.constant 0 : i32
    %c0_i32_0 = arith.constant 0 : i32
    %c0_i32_1 = arith.constant 0 : i32
    return %c0_i32, %c0_i32_0 : i32, i32
  }
  func.func @transform_13(%arg0: i32) -> (i32, i32) {
    %c0_i32 = arith.constant 0 : i32
    %c0_i32_0 = arith.constant 0 : i32
    %c0_i32_1 = arith.constant 0 : i32
    return %c0_i32, %c0_i32_0 : i32, i32
  }
  func.func @transform_14(%arg0: i32) -> (i32, i32) {
    %c0_i32 = arith.constant 0 : i32
    %c0_i32_0 = arith.constant 0 : i32
    %c0_i32_1 = arith.constant 0 : i32
    return %c0_i32, %c0_i32_0 : i32, i32
  }
  func.func @transform_15(%arg0: i32) -> (i32, i32) {
    %c0_i32 = arith.constant 0 : i32
    %c0_i32_0 = arith.constant 0 : i32
    %c0_i32_1 = arith.constant 0 : i32
    return %c0_i32, %c0_i32_0 : i32, i32
  }
  func.func @transform_16(%arg0: i32) -> (i32, i32) {
    %c0_i32 = arith.constant 0 : i32
    %c0_i32_0 = arith.constant 0 : i32
    %c0_i32_1 = arith.constant 0 : i32
    return %c0_i32, %c0_i32_0 : i32, i32
  }
  func.func @transform_17(%arg0: i32) -> (i32, i32) {
    %c0_i32 = arith.constant 0 : i32
    %c0_i32_0 = arith.constant 0 : i32
    %c0_i32_1 = arith.constant 0 : i32
    return %c0_i32, %c0_i32_0 : i32, i32
  }
  func.func @transform_18(%arg0: i32) -> (i32, i32) {
    %c0_i32 = arith.constant 0 : i32
    %c0_i32_0 = arith.constant 0 : i32
    %c0_i32_1 = arith.constant 0 : i32
    return %c0_i32, %c0_i32_0 : i32, i32
  }
  func.func @transform_19(%arg0: i32) -> (i32, i32) {
    %c0_i32 = arith.constant 0 : i32
    %c0_i32_0 = arith.constant 0 : i32
    %c0_i32_1 = arith.constant 0 : i32
    return %c0_i32, %c0_i32_0 : i32, i32
  }
  func.func @transform_20(%arg0: i32) -> (i32, i32) {
    %c0_i32 = arith.constant 0 : i32
    %c0_i32_0 = arith.constant 0 : i32
    return %arg0, %c0_i32 : i32, i32
  }
  func.func @transform_21(%arg0: i32) -> (i32, i32) {
    %c0_i32 = arith.constant 0 : i32
    %c0_i32_0 = arith.constant 0 : i32
    return %arg0, %c0_i32 : i32, i32
  }
  func.func @transform_22(%arg0: i32) -> (i32, i32) {
    %c0_i32 = arith.constant 0 : i32
    %c0_i32_0 = arith.constant 0 : i32
    return %arg0, %c0_i32 : i32, i32
  }
}

</mosaic_0001>

<llo_original>
// kernel: multivae_forward.1
$region0: #{multivae_forward.1}
  #allocation0 [shape = 'u32[]', space=smem, size = 0x4, offset = 0x4, fixed_abs, tag = 'smem constant byte address 0x4 - core index']
  #allocation1 [shape = 'u32[144,128]{1,0:T(1,128)}', space=vmem, size = 0x12000, scoped, tag = 'internal scratch']
  %s0 = inlined_call_operand.vmem [shape: bf16[16,1024], index: 0, kind: input, shape index: {}]
  %s1 = inlined_call_operand.vmem [shape: bf16[16,128], index: 1, kind: input, shape index: {}]
  %s2 = inlined_call_operand.vmem [shape: f32[16,128], index: 2, kind: input, shape index: {}]
  %s3 = inlined_call_operand.vmem [shape: f32[16,128], index: 3, kind: input, shape index: {}]
  %s4 = inlined_call_operand.vmem [shape: bf16[1024,128], index: 4, kind: input, shape index: {}]
  %s5 = inlined_call_operand.vmem [shape: f32[1,128], index: 5, kind: input, shape index: {}]
  %s6 = inlined_call_operand.vmem [shape: bf16[128,256], index: 6, kind: input, shape index: {}]
  %s7 = inlined_call_operand.vmem [shape: f32[1,256], index: 7, kind: input, shape index: {}]
  %s8 = inlined_call_operand.vmem [shape: bf16[128,128], index: 8, kind: input, shape index: {}]
  %s9 = inlined_call_operand.vmem [shape: f32[1,128], index: 9, kind: input, shape index: {}]
  %s10 = inlined_call_operand.vmem [shape: bf16[128,256], index: 10, kind: input, shape index: {}]
  %s11 = inlined_call_operand.vmem [shape: f32[1,256], index: 11, kind: input, shape index: {}]
  %s12 = inlined_call_operand.vmem [shape: bf16[128,128], index: 12, kind: input, shape index: {}]
  %s13 = inlined_call_operand.vmem [shape: f32[1,128], index: 13, kind: input, shape index: {}]
  %s14 = inlined_call_operand.vmem [shape: bf16[128,1024], index: 14, kind: input, shape index: {}]
  %s15 = inlined_call_operand.vmem [shape: f32[1,1024], index: 15, kind: input, shape index: {}]
  %s16 = inlined_call_operand.vmem [shape: bf16[128,128], index: 16, kind: input, shape index: {}]
  %s17 = inlined_call_operand.vmem [shape: f32[1,128], index: 17, kind: input, shape index: {}]
  %s18 = inlined_call_operand.vmem [shape: bf16[128,128], index: 18, kind: input, shape index: {}]
  %s19 = inlined_call_operand.vmem [shape: f32[1,128], index: 19, kind: input, shape index: {}]
  %s20 = inlined_call_operand.vmem [shape: f32[16,1024], index: 20, kind: output, shape index: {0}]
  %s21 = inlined_call_operand.hbm [shape: f32[16,128], index: 21, kind: output, shape index: {1}]
  %s22 = inlined_call_operand.vmem [shape: f32[16,256], index: 22, kind: output, shape index: {2}]
  %23 = xla_tuple %s20, %s21, %s22
  %s24 = sld [smem:[#allocation0]]
  $region129: #{multivae_forward.1} parent=0
    _
  %s26 = ssub.s32 1, %s24
  %s27 = scalar_select 0, %s26, %s24
  $region1: #{multivae_forward.1} parent=0
    #allocation2 [shape = 'u8[8192]{0}', space=vmem, size = 0x2000, scoped, tag = 'output window, operand 1']
    #allocation3 [shape = 's32[2]{0}', space=sflag, size = 0x8, scoped, tag = 'scoped memory for multivae_forward.1']
    %28 = vsyncpa [#allocation3], 0
    %s29 = scalar_lea.sflag [#allocation3], 1
    %30 = vsyncpa %s29, 0
    loop: start=0, step=1, limit=4
    $region2: #{multivae_forward.1} parent=1 // loop_pre_header
      _
    $region3: #{multivae_forward.1} parent=1 // loop_header
      %s32 = sphi 0, %s36
      %p33 = scmp.ge.s32.totalorder %s32, 4
      %s42 = sphi 0, %s44
      %s45 = sphi 0, %s42
      %s46 = sphi 0, %s45
      %s62 = sphi 0, %s46
      %s68 = sphi 0, %s70
      %s71 = sphi 0, %s68
      %s72 = sphi 0, %s71
      %s88 = sphi 0, %s72
      %s94 = sphi 0, %s96
      %s97 = sphi 0, %s94
      %s98 = sphi 0, %s97
      %s114 = sphi 0, %s98
      %s120 = sphi 0, %s122
      %s123 = sphi 0, %s120
      %s124 = sphi 0, %s123
      %s140 = sphi 0, %s124
      %s144 = sphi 0, %s144
      %s146 = sphi 0, %s144
      %s147 = sphi 0, %s146
      %s161 = sphi 0, %s147
      %s165 = sphi 0, %s165
      %s167 = sphi 0, %s165
      %s168 = sphi 0, %s167
      %s182 = sphi 0, %s168
      %s186 = sphi 0, %s186
      %s188 = sphi 0, %s186
      %s189 = sphi 0, %s188
      %s203 = sphi 0, %s189
      %s207 = sphi 0, %s207
      %s209 = sphi 0, %s207
      %s210 = sphi 0, %s209
      %s224 = sphi 0, %s210
      %s228 = sphi 0, %s228
      %s230 = sphi 0, %s228
      %s231 = sphi 0, %s230
      %s245 = sphi 0, %s231
      %s249 = sphi 0, %s249
      %s251 = sphi 0, %s249
      %s252 = sphi 0, %s251
      %s266 = sphi 0, %s252
      %s270 = sphi 0, %s270
      %s272 = sphi 0, %s270
      %s273 = sphi 0, %s272
      %s287 = sphi 0, %s273
      %s291 = sphi 0, %s291
      %s293 = sphi 0, %s291
      %s294 = sphi 0, %s293
      %s308 = sphi 0, %s294
      %s312 = sphi 0, %s312
      %s314 = sphi 0, %s312
      %s315 = sphi 0, %s314
      %s329 = sphi 0, %s315
      %s333 = sphi 0, %s333
      %s335 = sphi 0, %s333
      %s336 = sphi 0, %s335
      %s350 = sphi 0, %s336
      %s354 = sphi 0, %s354
      %s356 = sphi 0, %s354
      %s357 = sphi 0, %s356
      %s371 = sphi 0, %s357
      %s375 = sphi 0, %s375
      %s377 = sphi 0, %s375
      %s378 = sphi 0, %s377
      %s392 = sphi 0, %s378
      %s396 = sphi 0, %s396
      %s398 = sphi 0, %s396
      %s399 = sphi 0, %s398
      %s413 = sphi 0, %s399
      %s417 = sphi 0, %s417
      %s419 = sphi 0, %s417
      %s420 = sphi 0, %s419
      %s434 = sphi 0, %s420
      %s438 = sphi 0, %s438
      %s440 = sphi 0, %s438
      %s441 = sphi 0, %s440
      %s455 = sphi 0, %s441
      %s459 = sphi 0, %s459
      %s461 = sphi 0, %s459
      %s462 = sphi 0, %s461
      %s476 = sphi 0, %s462
      %s482 = sphi 0, %s484
      %s485 = sphi 0, %s482
      %s486 = sphi 0, %s485
      %s502 = sphi 0, %s486
      %s508 = sphi 0, %s510
      %s511 = sphi 0, %s508
      %s512 = sphi 0, %s511
      %s528 = sphi 0, %s512
      %s534 = sphi 0, %s536
      %s537 = sphi 0, %s534
      %s538 = sphi 0, %s537
      %s554 = sphi 0, %s538
    $region4: #{multivae_forward.1} parent=1 // loop_header_branch
      %35 = sbr.rel (%p33) target = $region8
    $region5: #{multivae_forward.1} parent=1 // loop_body
      %s37 = ssub.s32 %s32, 1
      %s38 = ssub.s32 %s32, 2
      %s39 = sadd.s32 %s32, 1
      %s40 = ssub.s32 %s32, %s39
      %p41 = scmp.eq.s32.totalorder %s40, 0
      %s43 = sadd.s32 %s42, 1
      %s44 = scalar_select %p41, %s42, %s43
      %p47 = pneg %p41
      %p48 = scmp.eq.s32.totalorder %s32, 1
      %p49 = por %p47, %p48
      %p50 = scmp.ne.s32.totalorder %s42, %s45
      %p51 = scmp.eq.s32.totalorder %s32, 0
      %p52 = por %p50, %p51
      %p53 = scmp.ne.s32.totalorder %s42, %s45
      %p54 = scmp.eq.s32.totalorder %s37, 1
      %p55 = por %p53, %p54
      %p56 = scmp.ne.s32.totalorder %s45, %s46
      %p57 = scmp.eq.s32.totalorder %s37, 0
      %p58 = por %p56, %p57
      %p59 = scmp.ne.s32.totalorder %s45, %s46
      %p60 = scmp.eq.s32.totalorder %s38, 1
      %p61 = por %p59, %p60
      %p63 = scmp.ne.s32.totalorder %s46, %s62
      %p64 = scmp.eq.s32.totalorder %s38, 0
      %p65 = por %p63, %p64
      %s66 = ssub.s32 %s32, %s39
      %p67 = scmp.eq.s32.totalorder %s66, 0
      %s69 = sadd.s32 %s68, 1
      %s70 = scalar_select %p67, %s68, %s69
      %p73 = pneg %p67
      %p74 = scmp.eq.s32.totalorder %s32, 1
      %p75 = por %p73, %p74
      %p76 = scmp.ne.s32.totalorder %s68, %s71
      %p77 = scmp.eq.s32.totalorder %s32, 0
      %p78 = por %p76, %p77
      %p79 = scmp.ne.s32.totalorder %s68, %s71
      %p80 = scmp.eq.s32.totalorder %s37, 1
      %p81 = por %p79, %p80
      %p82 = scmp.ne.s32.totalorder %s71, %s72
      %p83 = scmp.eq.s32.totalorder %s37, 0
      %p84 = por %p82, %p83
      %p85 = scmp.ne.s32.totalorder %s71, %s72
      %p86 = scmp.eq.s32.totalorder %s38, 1
      %p87 = por %p85, %p86
      %p89 = scmp.ne.s32.totalorder %s72, %s88
      %p90 = scmp.eq.s32.totalorder %s38, 0
      %p91 = por %p89, %p90
      %s92 = ssub.s32 %s32, %s39
      %p93 = scmp.eq.s32.totalorder %s92, 0
      %s95 = sadd.s32 %s94, 1
      %s96 = scalar_select %p93, %s94, %s95
      %p99 = pneg %p93
      %p100 = scmp.eq.s32.totalorder %s32, 1
      %p101 = por %p99, %p100
      %p102 = scmp.ne.s32.totalorder %s94, %s97
      %p103 = scmp.eq.s32.totalorder %s32, 0
      %p104 = por %p102, %p103
      %p105 = scmp.ne.s32.totalorder %s94, %s97
      %p106 = scmp.eq.s32.totalorder %s37, 1
      %p107 = por %p105, %p106
      %p108 = scmp.ne.s32.totalorder %s97, %s98
      %p109 = scmp.eq.s32.totalorder %s37, 0
      %p110 = por %p108, %p109
      %p111 = scmp.ne.s32.totalorder %s97, %s98
      %p112 = scmp.eq.s32.totalorder %s38, 1
      %p113 = por %p111, %p112
      %p115 = scmp.ne.s32.totalorder %s98, %s114
      %p116 = scmp.eq.s32.totalorder %s38, 0
      %p117 = por %p115, %p116
      %s118 = ssub.s32 %s32, %s39
      %p119 = scmp.eq.s32.totalorder %s118, 0
      %s121 = sadd.s32 %s120, 1
      %s122 = scalar_select %p119, %s120, %s121
      %p125 = pneg %p119
      %p126 = scmp.eq.s32.totalorder %s32, 1
      %p127 = por %p125, %p126
      %p128 = scmp.ne.s32.totalorder %s120, %s123
      %p129 = scmp.eq.s32.totalorder %s32, 0
      %p130 = por %p128, %p129
      %p131 = scmp.ne.s32.totalorder %s120, %s123
      %p132 = scmp.eq.s32.totalorder %s37, 1
      %p133 = por %p131, %p132
      %p134 = scmp.ne.s32.totalorder %s123, %s124
      %p135 = scmp.eq.s32.totalorder %s37, 0
      %p136 = por %p134, %p135
      %p137 = scmp.ne.s32.totalorder %s123, %s124
      %p138 = scmp.eq.s32.totalorder %s38, 1
      %p139 = por %p137, %p138
      %p141 = scmp.ne.s32.totalorder %s124, %s140
      %p142 = scmp.eq.s32.totalorder %s38, 0
      %p143 = por %p141, %p142
      %s145 = sadd.s32 %s144, 1
      %p148 = scmp.eq.s32.totalorder %s32, 1
      %p149 = scmp.ne.s32.totalorder %s144, %s146
      %p150 = scmp.eq.s32.totalorder %s32, 0
      %p151 = por %p149, %p150
      %p152 = scmp.ne.s32.totalorder %s144, %s146
      %p153 = scmp.eq.s32.totalorder %s37, 1
      %p154 = por %p152, %p153
      %p155 = scmp.ne.s32.totalorder %s146, %s147
      %p156 = scmp.eq.s32.totalorder %s37, 0
      %p157 = por %p155, %p156
      %p158 = scmp.ne.s32.totalorder %s146, %s147
      %p159 = scmp.eq.s32.totalorder %s38, 1
      %p160 = por %p158, %p159
      %p162 = scmp.ne.s32.totalorder %s147, %s161
      %p163 = scmp.eq.s32.totalorder %s38, 0
      %p164 = por %p162, %p163
      %s166 = sadd.s32 %s165, 1
      %p169 = scmp.eq.s32.totalorder %s32, 1
      %p170 = scmp.ne.s32.totalorder %s165, %s167
      %p171 = scmp.eq.s32.totalorder %s32, 0
      %p172 = por %p170, %p171
      %p173 = scmp.ne.s32.totalorder %s165, %s167
      %p174 = scmp.eq.s32.totalorder %s37, 1
      %p175 = por %p173, %p174
      %p176 = scmp.ne.s32.totalorder %s167, %s168
      %p177 = scmp.eq.s32.totalorder %s37, 0
      %p178 = por %p176, %p177
      %p179 = scmp.ne.s32.totalorder %s167, %s168
      %p180 = scmp.eq.s32.totalorder %s38, 1
      %p181 = por %p179, %p180
      %p183 = scmp.ne.s32.totalorder %s168, %s182
      %p184 = scmp.eq.s32.totalorder %s38, 0
      %p185 = por %p183, %p184
      %s187 = sadd.s32 %s186, 1
      %p190 = scmp.eq.s32.totalorder %s32, 1
      %p191 = scmp.ne.s32.totalorder %s186, %s188
      %p192 = scmp.eq.s32.totalorder %s32, 0
      %p193 = por %p191, %p192
      %p194 = scmp.ne.s32.totalorder %s186, %s188
      %p195 = scmp.eq.s32.totalorder %s37, 1
      %p196 = por %p194, %p195
      %p197 = scmp.ne.s32.totalorder %s188, %s189
      %p198 = scmp.eq.s32.totalorder %s37, 0
      %p199 = por %p197, %p198
      %p200 = scmp.ne.s32.totalorder %s188, %s189
      %p201 = scmp.eq.s32.totalorder %s38, 1
      %p202 = por %p200, %p201
      %p204 = scmp.ne.s32.totalorder %s189, %s203
      %p205 = scmp.eq.s32.totalorder %s38, 0
      %p206 = por %p204, %p205
      %s208 = sadd.s32 %s207, 1
      %p211 = scmp.eq.s32.totalorder %s32, 1
      %p212 = scmp.ne.s32.totalorder %s207, %s209
      %p213 = scmp.eq.s32.totalorder %s32, 0
      %p214 = por %p212, %p213
      %p215 = scmp.ne.s32.totalorder %s207, %s209
      %p216 = scmp.eq.s32.totalorder %s37, 1
      %p217 = por %p215, %p216
      %p218 = scmp.ne.s32.totalorder %s209, %s210
      %p219 = scmp.eq.s32.totalorder %s37, 0
      %p220 = por %p218, %p219
      %p221 = scmp.ne.s32.totalorder %s209, %s210
      %p222 = scmp.eq.s32.totalorder %s38, 1
      %p223 = por %p221, %p222
      %p225 = scmp.ne.s32.totalorder %s210, %s224
      %p226 = scmp.eq.s32.totalorder %s38, 0
      %p227 = por %p225, %p226
      %s229 = sadd.s32 %s228, 1
      %p232 = scmp.eq.s32.totalorder %s32, 1
      %p233 = scmp.ne.s32.totalorder %s228, %s230
      %p234 = scmp.eq.s32.totalorder %s32, 0
      %p235 = por %p233, %p234
      %p236 = scmp.ne.s32.totalorder %s228, %s230
      %p237 = scmp.eq.s32.totalorder %s37, 1
      %p238 = por %p236, %p237
      %p239 = scmp.ne.s32.totalorder %s230, %s231
      %p240 = scmp.eq.s32.totalorder %s37, 0
      %p241 = por %p239, %p240
      %p242 = scmp.ne.s32.totalorder %s230, %s231
      %p243 = scmp.eq.s32.totalorder %s38, 1
      %p244 = por %p242, %p243
      %p246 = scmp.ne.s32.totalorder %s231, %s245
      %p247 = scmp.eq.s32.totalorder %s38, 0
      %p248 = por %p246, %p247
      %s250 = sadd.s32 %s249, 1
      %p253 = scmp.eq.s32.totalorder %s32, 1
      %p254 = scmp.ne.s32.totalorder %s249, %s251
      %p255 = scmp.eq.s32.totalorder %s32, 0
      %p256 = por %p254, %p255
      %p257 = scmp.ne.s32.totalorder %s249, %s251
      %p258 = scmp.eq.s32.totalorder %s37, 1
      %p259 = por %p257, %p258
      %p260 = scmp.ne.s32.totalorder %s251, %s252
      %p261 = scmp.eq.s32.totalorder %s37, 0
      %p262 = por %p260, %p261
      %p263 = scmp.ne.s32.totalorder %s251, %s252
      %p264 = scmp.eq.s32.totalorder %s38, 1
      %p265 = por %p263, %p264
      %p267 = scmp.ne.s32.totalorder %s252, %s266
      %p268 = scmp.eq.s32.totalorder %s38, 0
      %p269 = por %p267, %p268
      %s271 = sadd.s32 %s270, 1
      %p274 = scmp.eq.s32.totalorder %s32, 1
      %p275 = scmp.ne.s32.totalorder %s270, %s272
      %p276 = scmp.eq.s32.totalorder %s32, 0
      %p277 = por %p275, %p276
      %p278 = scmp.ne.s32.totalorder %s270, %s272
      %p279 = scmp.eq.s32.totalorder %s37, 1
      %p280 = por %p278, %p279
      %p281 = scmp.ne.s32.totalorder %s272, %s273
      %p282 = scmp.eq.s32.totalorder %s37, 0
      %p283 = por %p281, %p282
      %p284 = scmp.ne.s32.totalorder %s272, %s273
      %p285 = scmp.eq.s32.totalorder %s38, 1
      %p286 = por %p284, %p285
      %p288 = scmp.ne.s32.totalorder %s273, %s287
      %p289 = scmp.eq.s32.totalorder %s38, 0
      %p290 = por %p288, %p289
      %s292 = sadd.s32 %s291, 1
      %p295 = scmp.eq.s32.totalorder %s32, 1
      %p296 = scmp.ne.s32.totalorder %s291, %s293
      %p297 = scmp.eq.s32.totalorder %s32, 0
      %p298 = por %p296, %p297
      %p299 = scmp.ne.s32.totalorder %s291, %s293
      %p300 = scmp.eq.s32.totalorder %s37, 1
      %p301 = por %p299, %p300
      %p302 = scmp.ne.s32.totalorder %s293, %s294
      %p303 = scmp.eq.s32.totalorder %s37, 0
      %p304 = por %p302, %p303
      %p305 = scmp.ne.s32.totalorder %s293, %s294
      %p306 = scmp.eq.s32.totalorder %s38, 1
      %p307 = por %p305, %p306
      %p309 = scmp.ne.s32.totalorder %s294, %s308
      %p310 = scmp.eq.s32.totalorder %s38, 0
      %p311 = por %p309, %p310
      %s313 = sadd.s32 %s312, 1
      %p316 = scmp.eq.s32.totalorder %s32, 1
      %p317 = scmp.ne.s32.totalorder %s312, %s314
      %p318 = scmp.eq.s32.totalorder %s32, 0
      %p319 = por %p317, %p318
      %p320 = scmp.ne.s32.totalorder %s312, %s314
      %p321 = scmp.eq.s32.totalorder %s37, 1
      %p322 = por %p320, %p321
      %p323 = scmp.ne.s32.totalorder %s314, %s315
      %p324 = scmp.eq.s32.totalorder %s37, 0
      %p325 = por %p323, %p324
      %p326 = scmp.ne.s32.totalorder %s314, %s315
      %p327 = scmp.eq.s32.totalorder %s38, 1
      %p328 = por %p326, %p327
      %p330 = scmp.ne.s32.totalorder %s315, %s329
      %p331 = scmp.eq.s32.totalorder %s38, 0
      %p332 = por %p330, %p331
      %s334 = sadd.s32 %s333, 1
      %p337 = scmp.eq.s32.totalorder %s32, 1
      %p338 = scmp.ne.s32.totalorder %s333, %s335
      %p339 = scmp.eq.s32.totalorder %s32, 0
      %p340 = por %p338, %p339
      %p341 = scmp.ne.s32.totalorder %s333, %s335
      %p342 = scmp.eq.s32.totalorder %s37, 1
      %p343 = por %p341, %p342
      %p344 = scmp.ne.s32.totalorder %s335, %s336
      %p345 = scmp.eq.s32.totalorder %s37, 0
      %p346 = por %p344, %p345
      %p347 = scmp.ne.s32.totalorder %s335, %s336
      %p348 = scmp.eq.s32.totalorder %s38, 1
      %p349 = por %p347, %p348
      %p351 = scmp.ne.s32.totalorder %s336, %s350
      %p352 = scmp.eq.s32.totalorder %s38, 0
      %p353 = por %p351, %p352
      %s355 = sadd.s32 %s354, 1
      %p358 = scmp.eq.s32.totalorder %s32, 1
      %p359 = scmp.ne.s32.totalorder %s354, %s356
      %p360 = scmp.eq.s32.totalorder %s32, 0
      %p361 = por %p359, %p360
      %p362 = scmp.ne.s32.totalorder %s354, %s356
      %p363 = scmp.eq.s32.totalorder %s37, 1
      %p364 = por %p362, %p363
      %p365 = scmp.ne.s32.totalorder %s356, %s357
      %p366 = scmp.eq.s32.totalorder %s37, 0
      %p367 = por %p365, %p366
      %p368 = scmp.ne.s32.totalorder %s356, %s357
      %p369 = scmp.eq.s32.totalorder %s38, 1
      %p370 = por %p368, %p369
      %p372 = scmp.ne.s32.totalorder %s357, %s371
      %p373 = scmp.eq.s32.totalorder %s38, 0
      %p374 = por %p372, %p373
      %s376 = sadd.s32 %s375, 1
      %p379 = scmp.eq.s32.totalorder %s32, 1
      %p380 = scmp.ne.s32.totalorder %s375, %s377
      %p381 = scmp.eq.s32.totalorder %s32, 0
      %p382 = por %p380, %p381
      %p383 = scmp.ne.s32.totalorder %s375, %s377
      %p384 = scmp.eq.s32.totalorder %s37, 1
      %p385 = por %p383, %p384
      %p386 = scmp.ne.s32.totalorder %s377, %s378
      %p387 = scmp.eq.s32.totalorder %s37, 0
      %p388 = por %p386, %p387
      %p389 = scmp.ne.s32.totalorder %s377, %s378
      %p390 = scmp.eq.s32.totalorder %s38, 1
      %p391 = por %p389, %p390
      %p393 = scmp.ne.s32.totalorder %s378, %s392
      %p394 = scmp.eq.s32.totalorder %s38, 0
      %p395 = por %p393, %p394
      %s397 = sadd.s32 %s396, 1
      %p400 = scmp.eq.s32.totalorder %s32, 1
      %p401 = scmp.ne.s32.totalorder %s396, %s398
      %p402 = scmp.eq.s32.totalorder %s32, 0
      %p403 = por %p401, %p402
      %p404 = scmp.ne.s32.totalorder %s396, %s398
      %p405 = scmp.eq.s32.totalorder %s37, 1
      %p406 = por %p404, %p405
      %p407 = scmp.ne.s32.totalorder %s398, %s399
      %p408 = scmp.eq.s32.totalorder %s37, 0
      %p409 = por %p407, %p408
      %p410 = scmp.ne.s32.totalorder %s398, %s399
      %p411 = scmp.eq.s32.totalorder %s38, 1
      %p412 = por %p410, %p411
      %p414 = scmp.ne.s32.totalorder %s399, %s413
      %p415 = scmp.eq.s32.totalorder %s38, 0
      %p416 = por %p414, %p415
      %s418 = sadd.s32 %s417, 1
      %p421 = scmp.eq.s32.totalorder %s32, 1
      %p422 = scmp.ne.s32.totalorder %s417, %s419
      %p423 = scmp.eq.s32.totalorder %s32, 0
      %p424 = por %p422, %p423
      %p425 = scmp.ne.s32.totalorder %s417, %s419
      %p426 = scmp.eq.s32.totalorder %s37, 1
      %p427 = por %p425, %p426
      %p428 = scmp.ne.s32.totalorder %s419, %s420
      %p429 = scmp.eq.s32.totalorder %s37, 0
      %p430 = por %p428, %p429
      %p431 = scmp.ne.s32.totalorder %s419, %s420
      %p432 = scmp.eq.s32.totalorder %s38, 1
      %p433 = por %p431, %p432
      %p435 = scmp.ne.s32.totalorder %s420, %s434
      %p436 = scmp.eq.s32.totalorder %s38, 0
      %p437 = por %p435, %p436
      %s439 = sadd.s32 %s438, 1
      %p442 = scmp.eq.s32.totalorder %s32, 1
      %p443 = scmp.ne.s32.totalorder %s438, %s440
      %p444 = scmp.eq.s32.totalorder %s32, 0
      %p445 = por %p443, %p444
      %p446 = scmp.ne.s32.totalorder %s438, %s440
      %p447 = scmp.eq.s32.totalorder %s37, 1
      %p448 = por %p446, %p447
      %p449 = scmp.ne.s32.totalorder %s440, %s441
      %p450 = scmp.eq.s32.totalorder %s37, 0
      %p451 = por %p449, %p450
      %p452 = scmp.ne.s32.totalorder %s440, %s441
      %p453 = scmp.eq.s32.totalorder %s38, 1
      %p454 = por %p452, %p453
      %p456 = scmp.ne.s32.totalorder %s441, %s455
      %p457 = scmp.eq.s32.totalorder %s38, 0
      %p458 = por %p456, %p457
      %s460 = sadd.s32 %s459, 1
      %p463 = scmp.eq.s32.totalorder %s32, 1
      %p464 = scmp.ne.s32.totalorder %s459, %s461
      %p465 = scmp.eq.s32.totalorder %s32, 0
      %p466 = por %p464, %p465
      %p467 = scmp.ne.s32.totalorder %s459, %s461
      %p468 = scmp.eq.s32.totalorder %s37, 1
      %p469 = por %p467, %p468
      %p470 = scmp.ne.s32.totalorder %s461, %s462
      %p471 = scmp.eq.s32.totalorder %s37, 0
      %p472 = por %p470, %p471
      %p473 = scmp.ne.s32.totalorder %s461, %s462
      %p474 = scmp.eq.s32.totalorder %s38, 1
      %p475 = por %p473, %p474
      %p477 = scmp.ne.s32.totalorder %s462, %s476
      %p478 = scmp.eq.s32.totalorder %s38, 0
      %p479 = por %p477, %p478
      %s480 = ssub.s32 %s32, %s39
      %p481 = scmp.eq.s32.totalorder %s480, 0
      %s483 = sadd.s32 %s482, 1
      %s484 = scalar_select %p481, %s482, %s483
      %p487 = pneg %p481
      %p488 = scmp.eq.s32.totalorder %s32, 1
      %p489 = por %p487, %p488
      %p490 = scmp.ne.s32.totalorder %s482, %s485
      %p491 = scmp.eq.s32.totalorder %s32, 0
      %p492 = por %p490, %p491
      %p493 = scmp.ne.s32.totalorder %s482, %s485
      %p494 = scmp.eq.s32.totalorder %s37, 1
      %p495 = por %p493, %p494
      %p496 = scmp.ne.s32.totalorder %s485, %s486
      %p497 = scmp.eq.s32.totalorder %s37, 0
      %p498 = por %p496, %p497
      %p499 = scmp.ne.s32.totalorder %s485, %s486
      %p500 = scmp.eq.s32.totalorder %s38, 1
      %p501 = por %p499, %p500
      %p503 = scmp.ne.s32.totalorder %s486, %s502
      %p504 = scmp.eq.s32.totalorder %s38, 0
      %p505 = por %p503, %p504
      %s506 = ssub.s32 %s32, %s39
      %p507 = scmp.eq.s32.totalorder %s506, 0
      %s509 = sadd.s32 %s508, 1
      %s510 = scalar_select %p507, %s508, %s509
      %p513 = pneg %p507
      %p514 = scmp.eq.s32.totalorder %s32, 1
      %p515 = por %p513, %p514
      %p516 = scmp.ne.s32.totalorder %s508, %s511
      %p517 = scmp.eq.s32.totalorder %s32, 0
      %p518 = por %p516, %p517
      %p519 = scmp.ne.s32.totalorder %s508, %s511
      %p520 = scmp.eq.s32.totalorder %s37, 1
      %p521 = por %p519, %p520
      %p522 = scmp.ne.s32.totalorder %s511, %s512
      %p523 = scmp.eq.s32.totalorder %s37, 0
      %p524 = por %p522, %p523
      %p525 = scmp.ne.s32.totalorder %s511, %s512
      %p526 = scmp.eq.s32.totalorder %s38, 1
      %p527 = por %p525, %p526
      %p529 = scmp.ne.s32.totalorder %s512, %s528
      %p530 = scmp.eq.s32.totalorder %s38, 0
      %p531 = por %p529, %p530
      %s532 = ssub.s32 %s32, %s39
      %p533 = scmp.eq.s32.totalorder %s532, 0
      %s535 = sadd.s32 %s534, 1
      %s536 = scalar_select %p533, %s534, %s535
      %p539 = pneg %p533
      %p540 = scmp.eq.s32.totalorder %s32, 1
      %p541 = por %p539, %p540
      %p542 = scmp.ne.s32.totalorder %s534, %s537
      %p543 = scmp.eq.s32.totalorder %s32, 0
      %p544 = por %p542, %p543
      %p545 = scmp.ne.s32.totalorder %s534, %s537
      %p546 = scmp.eq.s32.totalorder %s37, 1
      %p547 = por %p545, %p546
      %p548 = scmp.ne.s32.totalorder %s537, %s538
      %p549 = scmp.eq.s32.totalorder %s37, 0
      %p550 = por %p548, %p549
      %p551 = scmp.ne.s32.totalorder %s537, %s538
      %p552 = scmp.eq.s32.totalorder %s38, 1
      %p553 = por %p551, %p552
      %p555 = scmp.ne.s32.totalorder %s538, %s554
      %p556 = scmp.eq.s32.totalorder %s38, 0
      %p557 = por %p555, %p556
      %p558 = scmp.le.s32.totalorder 1, %s32
      %p559 = scmp.lt.s32.totalorder %s32, 3
      %p560 = pnand %p558, %p559
      %p561 = pneg %p560
      // Predicated region
      $region9: #{multivae_forward.1} parent=5 // pred_check
        _
      $region10: #{multivae_forward.1} parent=5 // pred_check_branch
        %563 = sbr.rel (%p560) target = $region12
      $region11: #{multivae_forward.1} parent=5 // pred_region
        %s564 = ssub.s32 %s32, 1
        // Predicated region
        $region13: #{multivae_forward.1} parent=11 // pred_check
          %p565 = pneg %p157
        $region14: #{multivae_forward.1} parent=11 // pred_check_branch
          %567 = sbr.rel (%p565) target = $region16
        $region15: #{multivae_forward.1} parent=11 // pred_region
          _
        $region16: #{multivae_forward.1} parent=11 // pred_fallthru
          _
        // Predicated region
        $region17: #{multivae_forward.1} parent=11 // pred_check
          %p568 = pneg %p178
        $region18: #{multivae_forward.1} parent=11 // pred_check_branch
          %570 = sbr.rel (%p568) target = $region20
        $region19: #{multivae_forward.1} parent=11 // pred_region
          _
        $region20: #{multivae_forward.1} parent=11 // pred_fallthru
          _
        // Predicated region
        $region21: #{multivae_forward.1} parent=11 // pred_check
          %p571 = pneg %p199
        $region22: #{multivae_forward.1} parent=11 // pred_check_branch
          %573 = sbr.rel (%p571) target = $region24
        $region23: #{multivae_forward.1} parent=11 // pred_region
          _
        $region24: #{multivae_forward.1} parent=11 // pred_fallthru
          _
        // Predicated region
        $region25: #{multivae_forward.1} parent=11 // pred_check
          %p574 = pneg %p220
        $region26: #{multivae_forward.1} parent=11 // pred_check_branch
          %576 = sbr.rel (%p574) target = $region28
        $region27: #{multivae_forward.1} parent=11 // pred_region
          _
        $region28: #{multivae_forward.1} parent=11 // pred_fallthru
          _
        // Predicated region
        $region29: #{multivae_forward.1} parent=11 // pred_check
          %p577 = pneg %p241
        $region30: #{multivae_forward.1} parent=11 // pred_check_branch
          %579 = sbr.rel (%p577) target = $region32
        $region31: #{multivae_forward.1} parent=11 // pred_region
          _
        $region32: #{multivae_forward.1} parent=11 // pred_fallthru
          _
        // Predicated region
        $region33: #{multivae_forward.1} parent=11 // pred_check
          %p580 = pneg %p262
        $region34: #{multivae_forward.1} parent=11 // pred_check_branch
          %582 = sbr.rel (%p580) target = $region36
        $region35: #{multivae_forward.1} parent=11 // pred_region
          _
        $region36: #{multivae_forward.1} parent=11 // pred_fallthru
          _
        // Predicated region
        $region37: #{multivae_forward.1} parent=11 // pred_check
          %p583 = pneg %p283
        $region38: #{multivae_forward.1} parent=11 // pred_check_branch
          %585 = sbr.rel (%p583) target = $region40
        $region39: #{multivae_forward.1} parent=11 // pred_region
          _
        $region40: #{multivae_forward.1} parent=11 // pred_fallthru
          _
        // Predicated region
        $region41: #{multivae_forward.1} parent=11 // pred_check
          %p586 = pneg %p304
        $region42: #{multivae_forward.1} parent=11 // pred_check_branch
          %588 = sbr.rel (%p586) target = $region44
        $region43: #{multivae_forward.1} parent=11 // pred_region
          _
        $region44: #{multivae_forward.1} parent=11 // pred_fallthru
          _
        // Predicated region
        $region45: #{multivae_forward.1} parent=11 // pred_check
          %p589 = pneg %p325
        $region46: #{multivae_forward.1} parent=11 // pred_check_branch
          %591 = sbr.rel (%p589) target = $region48
        $region47: #{multivae_forward.1} parent=11 // pred_region
          _
        $region48: #{multivae_forward.1} parent=11 // pred_fallthru
          _
        // Predicated region
        $region49: #{multivae_forward.1} parent=11 // pred_check
          %p592 = pneg %p346
        $region50: #{multivae_forward.1} parent=11 // pred_check_branch
          %594 = sbr.rel (%p592) target = $region52
        $region51: #{multivae_forward.1} parent=11 // pred_region
          _
        $region52: #{multivae_forward.1} parent=11 // pred_fallthru
          _
        // Predicated region
        $region53: #{multivae_forward.1} parent=11 // pred_check
          %p595 = pneg %p367
        $region54: #{multivae_forward.1} parent=11 // pred_check_branch
          %597 = sbr.rel (%p595) target = $region56
        $region55: #{multivae_forward.1} parent=11 // pred_region
          _
        $region56: #{multivae_forward.1} parent=11 // pred_fallthru
          _
        // Predicated region
        $region57: #{multivae_forward.1} parent=11 // pred_check
          %p598 = pneg %p388
        $region58: #{multivae_forward.1} parent=11 // pred_check_branch
          %600 = sbr.rel (%p598) target = $region60
        $region59: #{multivae_forward.1} parent=11 // pred_region
          _
        $region60: #{multivae_forward.1} parent=11 // pred_fallthru
          _
        // Predicated region
        $region61: #{multivae_forward.1} parent=11 // pred_check
          %p601 = pneg %p409
        $region62: #{multivae_forward.1} parent=11 // pred_check_branch
          %603 = sbr.rel (%p601) target = $region64
        $region63: #{multivae_forward.1} parent=11 // pred_region
          _
        $region64: #{multivae_forward.1} parent=11 // pred_fallthru
          _
        // Predicated region
        $region65: #{multivae_forward.1} parent=11 // pred_check
          %p604 = pneg %p430
        $region66: #{multivae_forward.1} parent=11 // pred_check_branch
          %606 = sbr.rel (%p604) target = $region68
        $region67: #{multivae_forward.1} parent=11 // pred_region
          _
        $region68: #{multivae_forward.1} parent=11 // pred_fallthru
          _
        // Predicated region
        $region69: #{multivae_forward.1} parent=11 // pred_check
          %p607 = pneg %p451
        $region70: #{multivae_forward.1} parent=11 // pred_check_branch
          %609 = sbr.rel (%p607) target = $region72
        $region71: #{multivae_forward.1} parent=11 // pred_region
          _
        $region72: #{multivae_forward.1} parent=11 // pred_fallthru
          _
        // Predicated region
        $region73: #{multivae_forward.1} parent=11 // pred_check
          %p610 = pneg %p472
        $region74: #{multivae_forward.1} parent=11 // pred_check_branch
          %612 = sbr.rel (%p610) target = $region76
        $region75: #{multivae_forward.1} parent=11 // pred_region
          _
        $region76: #{multivae_forward.1} parent=11 // pred_fallthru
          _
      $region12: #{multivae_forward.1} parent=5 // pred_fallthru
        _
      %p613 = scmp.lt.s32.totalorder %s32, 2
      // Predicated region
      $region77: #{multivae_forward.1} parent=5 // pred_check
        %p614 = pneg %p613
      $region78: #{multivae_forward.1} parent=5 // pred_check_branch
        %616 = sbr.rel (%p614) target = $region80
      $region79: #{multivae_forward.1} parent=5 // pred_region
        // Predicated region
        $region81: #{multivae_forward.1} parent=79 // pred_check
          %p617 = pneg %p52
        $region82: #{multivae_forward.1} parent=79 // pred_check_branch
          %619 = sbr.rel (%p617) target = $region84
        $region83: #{multivae_forward.1} parent=79 // pred_region
          %p620 = scmp.lt.s32.totalorder %s32, 1
          %s621 = scalar_select %p620, %s32, 1
          %s622 = smul.addr %s621, 8
          %s623 = smul.addr %s622, 4
          %s624 = scalar_lea.vmem %s0, %s623
        $region84: #{multivae_forward.1} parent=79 // pred_fallthru
          _
        // Predicated region
        $region85: #{multivae_forward.1} parent=79 // pred_check
          %p625 = pneg %p78
        $region86: #{multivae_forward.1} parent=79 // pred_check_branch
          %627 = sbr.rel (%p625) target = $region88
        $region87: #{multivae_forward.1} parent=79 // pred_region
          %p628 = scmp.lt.s32.totalorder %s32, 1
          %s629 = scalar_select %p628, %s32, 1
          %s630 = smul.addr %s629, 4
          %s631 = scalar_lea.vmem %s1, %s630
        $region88: #{multivae_forward.1} parent=79 // pred_fallthru
          _
        // Predicated region
        $region89: #{multivae_forward.1} parent=79 // pred_check
          %p632 = pneg %p104
        $region90: #{multivae_forward.1} parent=79 // pred_check_branch
          %634 = sbr.rel (%p632) target = $region92
        $region91: #{multivae_forward.1} parent=79 // pred_region
          %p635 = scmp.lt.s32.totalorder %s32, 1
          %s636 = scalar_select %p635, %s32, 1
          %s637 = smul.addr %s636, 8
          %s638 = scalar_lea.vmem %s2, %s637
        $region92: #{multivae_forward.1} parent=79 // pred_fallthru
          _
        // Predicated region
        $region93: #{multivae_forward.1} parent=79 // pred_check
          %p639 = pneg %p130
        $region94: #{multivae_forward.1} parent=79 // pred_check_branch
          %641 = sbr.rel (%p639) target = $region96
        $region95: #{multivae_forward.1} parent=79 // pred_region
          %p642 = scmp.lt.s32.totalorder %s32, 1
          %s643 = scalar_select %p642, %s32, 1
          %s644 = smul.addr %s643, 8
          %s645 = scalar_lea.vmem %s3, %s644
        $region96: #{multivae_forward.1} parent=79 // pred_fallthru
          _
      $region80: #{multivae_forward.1} parent=5 // pred_fallthru
        _
      %p646 = scmp.le.s32.totalorder 1, %s32
      %p647 = scmp.lt.s32.totalorder %s32, 3
      %p648 = pnand %p646, %p647
      %p649 = pneg %p648
      // Predicated region
      $region97: #{multivae_forward.1} parent=5 // pred_check
        _
      $region98: #{multivae_forward.1} parent=5 // pred_check_branch
        %651 = sbr.rel (%p648) target = $region100
      $region99: #{multivae_forward.1} parent=5 // pred_region
        %s652 = ssub.s32 %s32, 1
        %p653 = scmp.lt.s32.totalorder %s37, 1
        %s654 = scalar_select %p653, %s37, 1
        %s655 = smul.addr %s654, 8
        %s656 = smul.addr %s655, 4
        %s657 = scalar_lea.vmem %s0, %s656
        %p658 = pneg %p58
        %p659 = pneg %p55
        %p660 = scmp.lt.s32.totalorder %s37, 1
        %s661 = scalar_select %p660, %s37, 1
        %s662 = smul.addr %s661, 4
        %s663 = scalar_lea.vmem %s1, %s662
        %p664 = pneg %p84
        %p665 = pneg %p81
        %p666 = scmp.lt.s32.totalorder %s37, 1
        %s667 = scalar_select %p666, %s37, 1
        %s668 = smul.addr %s667, 8
        %s669 = scalar_lea.vmem %s2, %s668
        %p670 = pneg %p110
        %p671 = pneg %p107
        %p672 = scmp.lt.s32.totalorder %s37, 1
        %s673 = scalar_select %p672, %s37, 1
        %s674 = smul.addr %s673, 8
        %s675 = scalar_lea.vmem %s3, %s674
        %p676 = pneg %p136
        %p677 = pneg %p133
        %p678 = pneg %p157
        %p679 = pneg %p154
        %p680 = pneg %p178
        %p681 = pneg %p175
        %p682 = pneg %p199
        %p683 = pneg %p196
        %p684 = pneg %p220
        %p685 = pneg %p217
        %p686 = pneg %p241
        %p687 = pneg %p238
        %p688 = pneg %p262
        %p689 = pneg %p259
        %p690 = pneg %p283
        %p691 = pneg %p280
        %p692 = pneg %p304
        %p693 = pneg %p301
        %p694 = pneg %p325
        %p695 = pneg %p322
        %p696 = pneg %p346
        %p697 = pneg %p343
        %p698 = pneg %p367
        %p699 = pneg %p364
        %p700 = pneg %p388
        %p701 = pneg %p385
        %p702 = pneg %p409
        %p703 = pneg %p406
        %p704 = pneg %p430
        %p705 = pneg %p427
        %p706 = pneg %p451
        %p707 = pneg %p448
        %p708 = pneg %p472
        %p709 = pneg %p469
        %p710 = pneg %p498
        %p711 = pneg %p495
        %p712 = scmp.lt.s32.totalorder %s37, 1
        %s713 = scalar_select %p712, %s37, 1
        %s714 = smul.addr %s713, 8
        %s715 = smul.addr %s714, 8
        %s716 = scalar_lea.vmem %s20, %s715
        %p717 = pneg %p524
        %p718 = pneg %p521
        %s719 = sand.u32 %s511, 1
        %s720 = scalar_lea.sflag [#allocation3], %s719
        %s721 = sand.u32 %s511, 1
        %s722 = smul.addr %s721, 8
        %s723 = scalar_lea.vmem [#allocation2], %s722
        %p724 = pneg %p550
        %p725 = pneg %p547
        %p726 = scmp.lt.s32.totalorder %s37, 1
        %s727 = scalar_select %p726, %s37, 1
        %s728 = smul.addr %s727, 2
        %s729 = smul.addr %s728, 8
        %s730 = scalar_lea.vmem %s22, %s729
        %p731 = scmp.lt.s32.totalorder %s37, 1
        %s732 = scalar_select %p731, %s37, 1
        %s733 = smul.addr %s732, 8
        %s734 = smul.addr %s733, 4
        %s735 = scalar_lea.vmem %s0, %s734
        %p736 = scmp.lt.s32.totalorder %s37, 1
        %s737 = scalar_select %p736, %s37, 1
        %s738 = smul.addr %s737, 4
        %s739 = scalar_lea.vmem %s1, %s738
        %p740 = scmp.lt.s32.totalorder %s37, 1
        %s741 = scalar_select %p740, %s37, 1
        %s742 = smul.addr %s741, 8
        %s743 = scalar_lea.vmem %s2, %s742
        %p744 = scmp.lt.s32.totalorder %s37, 1
        %s745 = scalar_select %p744, %s37, 1
        %s746 = smul.addr %s745, 8
        %s747 = scalar_lea.vmem %s3, %s746
        %p748 = scmp.lt.s32.totalorder %s37, 1
        %s749 = scalar_select %p748, %s37, 1
        %s750 = smul.addr %s749, 8
        %s751 = smul.addr %s750, 8
        %s752 = scalar_lea.vmem %s20, %s751
        %p753 = scmp.lt.s32.totalorder %s37, 1
        %s754 = scalar_select %p753, %s37, 1
        %s755 = smul.addr %s754, 2
        %s756 = smul.addr %s755, 8
        %s757 = scalar_lea.vmem %s22, %s756
        %v759 = vld [vmem:[%s735] sm:$0xff]
        %v760 = vld [vmem:[%s735 + $0x8] sm:$0xff]
        %v761 = vld [vmem:[%s735 + $0x10] sm:$0xff]
        %v762 = vld [vmem:[%s735 + $0x18] sm:$0xff]
        %v763 = vld [vmem:[%s4] sm:$0xf]
        %v764 = vld [vmem:[%s4 + $0x4] sm:$0xf]
        %v765 = vld [vmem:[%s4 + $0x8] sm:$0xf]
        %v766 = vld [vmem:[%s4 + $0xc] sm:$0xf]
        %v767 = vld [vmem:[%s4 + $0x10] sm:$0xf]
        %v768 = vld [vmem:[%s4 + $0x14] sm:$0xf]
        %v769 = vld [vmem:[%s4 + $0x18] sm:$0xf]
        %v770 = vld [vmem:[%s4 + $0x1c] sm:$0xf]
        %v771 = vld [vmem:[%s4 + $0x20] sm:$0xf]
        %v772 = vld [vmem:[%s4 + $0x24] sm:$0xf]
        %v773 = vld [vmem:[%s4 + $0x28] sm:$0xf]
        %v774 = vld [vmem:[%s4 + $0x2c] sm:$0xf]
        %v775 = vld [vmem:[%s4 + $0x30] sm:$0xf]
        %v776 = vld [vmem:[%s4 + $0x34] sm:$0xf]
        %v777 = vld [vmem:[%s4 + $0x38] sm:$0xf]
        %v778 = vld [vmem:[%s4 + $0x3c] sm:$0xf]
        %v779 = vld [vmem:[%s4 + $0x40] sm:$0xf]
        %v780 = vld [vmem:[%s4 + $0x44] sm:$0xf]
        %v781 = vld [vmem:[%s4 + $0x48] sm:$0xf]
        %v782 = vld [vmem:[%s4 + $0x4c] sm:$0xf]
        %v783 = vld [vmem:[%s4 + $0x50] sm:$0xf]
        %v784 = vld [vmem:[%s4 + $0x54] sm:$0xf]
        %v785 = vld [vmem:[%s4 + $0x58] sm:$0xf]
        %v786 = vld [vmem:[%s4 + $0x5c] sm:$0xf]
        %v787 = vld [vmem:[%s4 + $0x60] sm:$0xf]
        %v788 = vld [vmem:[%s4 + $0x64] sm:$0xf]
        %v789 = vld [vmem:[%s4 + $0x68] sm:$0xf]
        %v790 = vld [vmem:[%s4 + $0x6c] sm:$0xf]
        %v791 = vld [vmem:[%s4 + $0x70] sm:$0xf]
        %v792 = vld [vmem:[%s4 + $0x74] sm:$0xf]
        %v793 = vld [vmem:[%s4 + $0x78] sm:$0xf]
        %v794 = vld [vmem:[%s4 + $0x7c] sm:$0xf]
        %v795 = vld [vmem:[%s4 + $0x80] sm:$0xf]
        %v796 = vld [vmem:[%s4 + $0x84] sm:$0xf]
        %v797 = vld [vmem:[%s4 + $0x88] sm:$0xf]
        %v798 = vld [vmem:[%s4 + $0x8c] sm:$0xf]
        %v799 = vld [vmem:[%s4 + $0x90] sm:$0xf]
        %v800 = vld [vmem:[%s4 + $0x94] sm:$0xf]
        %v801 = vld [vmem:[%s4 + $0x98] sm:$0xf]
        %v802 = vld [vmem:[%s4 + $0x9c] sm:$0xf]
        %v803 = vld [vmem:[%s4 + $0xa0] sm:$0xf]
        %v804 = vld [vmem:[%s4 + $0xa4] sm:$0xf]
        %v805 = vld [vmem:[%s4 + $0xa8] sm:$0xf]
        %v806 = vld [vmem:[%s4 + $0xac] sm:$0xf]
        %v807 = vld [vmem:[%s4 + $0xb0] sm:$0xf]
        %v808 = vld [vmem:[%s4 + $0xb4] sm:$0xf]
        %v809 = vld [vmem:[%s4 + $0xb8] sm:$0xf]
        %v810 = vld [vmem:[%s4 + $0xbc] sm:$0xf]
        %v811 = vld [vmem:[%s4 + $0xc0] sm:$0xf]
        %v812 = vld [vmem:[%s4 + $0xc4] sm:$0xf]
        %v813 = vld [vmem:[%s4 + $0xc8] sm:$0xf]
        %v814 = vld [vmem:[%s4 + $0xcc] sm:$0xf]
        %v815 = vld [vmem:[%s4 + $0xd0] sm:$0xf]
        %v816 = vld [vmem:[%s4 + $0xd4] sm:$0xf]
        %v817 = vld [vmem:[%s4 + $0xd8] sm:$0xf]
        %v818 = vld [vmem:[%s4 + $0xdc] sm:$0xf]
        %v819 = vld [vmem:[%s4 + $0xe0] sm:$0xf]
        %v820 = vld [vmem:[%s4 + $0xe4] sm:$0xf]
        %v821 = vld [vmem:[%s4 + $0xe8] sm:$0xf]
        %v822 = vld [vmem:[%s4 + $0xec] sm:$0xf]
        %v823 = vld [vmem:[%s4 + $0xf0] sm:$0xf]
        %v824 = vld [vmem:[%s4 + $0xf4] sm:$0xf]
        %v825 = vld [vmem:[%s4 + $0xf8] sm:$0xf]
        %v826 = vld [vmem:[%s4 + $0xfc] sm:$0xf]
        %v827 = vld [vmem:[%s4 + $0x100] sm:$0xf]
        %v828 = vld [vmem:[%s4 + $0x104] sm:$0xf]
        %v829 = vld [vmem:[%s4 + $0x108] sm:$0xf]
        %v830 = vld [vmem:[%s4 + $0x10c] sm:$0xf]
        %v831 = vld [vmem:[%s4 + $0x110] sm:$0xf]
        %v832 = vld [vmem:[%s4 + $0x114] sm:$0xf]
        %v833 = vld [vmem:[%s4 + $0x118] sm:$0xf]
        %v834 = vld [vmem:[%s4 + $0x11c] sm:$0xf]
        %v835 = vld [vmem:[%s4 + $0x120] sm:$0xf]
        %v836 = vld [vmem:[%s4 + $0x124] sm:$0xf]
        %v837 = vld [vmem:[%s4 + $0x128] sm:$0xf]
        %v838 = vld [vmem:[%s4 + $0x12c] sm:$0xf]
        %v839 = vld [vmem:[%s4 + $0x130] sm:$0xf]
        %v840 = vld [vmem:[%s4 + $0x134] sm:$0xf]
        %v841 = vld [vmem:[%s4 + $0x138] sm:$0xf]
        %v842 = vld [vmem:[%s4 + $0x13c] sm:$0xf]
        %v843 = vld [vmem:[%s4 + $0x140] sm:$0xf]
        %v844 = vld [vmem:[%s4 + $0x144] sm:$0xf]
        %v845 = vld [vmem:[%s4 + $0x148] sm:$0xf]
        %v846 = vld [vmem:[%s4 + $0x14c] sm:$0xf]
        %v847 = vld [vmem:[%s4 + $0x150] sm:$0xf]
        %v848 = vld [vmem:[%s4 + $0x154] sm:$0xf]
        %v849 = vld [vmem:[%s4 + $0x158] sm:$0xf]
        %v850 = vld [vmem:[%s4 + $0x15c] sm:$0xf]
        %v851 = vld [vmem:[%s4 + $0x160] sm:$0xf]
        %v852 = vld [vmem:[%s4 + $0x164] sm:$0xf]
        %v853 = vld [vmem:[%s4 + $0x168] sm:$0xf]
        %v854 = vld [vmem:[%s4 + $0x16c] sm:$0xf]
        %v855 = vld [vmem:[%s4 + $0x170] sm:$0xf]
        %v856 = vld [vmem:[%s4 + $0x174] sm:$0xf]
        %v857 = vld [vmem:[%s4 + $0x178] sm:$0xf]
        %v858 = vld [vmem:[%s4 + $0x17c] sm:$0xf]
        %v859 = vld [vmem:[%s4 + $0x180] sm:$0xf]
        %v860 = vld [vmem:[%s4 + $0x184] sm:$0xf]
        %v861 = vld [vmem:[%s4 + $0x188] sm:$0xf]
        %v862 = vld [vmem:[%s4 + $0x18c] sm:$0xf]
        %v863 = vld [vmem:[%s4 + $0x190] sm:$0xf]
        %v864 = vld [vmem:[%s4 + $0x194] sm:$0xf]
        %v865 = vld [vmem:[%s4 + $0x198] sm:$0xf]
        %v866 = vld [vmem:[%s4 + $0x19c] sm:$0xf]
        %v867 = vld [vmem:[%s4 + $0x1a0] sm:$0xf]
        %v868 = vld [vmem:[%s4 + $0x1a4] sm:$0xf]
        %v869 = vld [vmem:[%s4 + $0x1a8] sm:$0xf]
        %v870 = vld [vmem:[%s4 + $0x1ac] sm:$0xf]
        %v871 = vld [vmem:[%s4 + $0x1b0] sm:$0xf]
        %v872 = vld [vmem:[%s4 + $0x1b4] sm:$0xf]
        %v873 = vld [vmem:[%s4 + $0x1b8] sm:$0xf]
        %v874 = vld [vmem:[%s4 + $0x1bc] sm:$0xf]
        %v875 = vld [vmem:[%s4 + $0x1c0] sm:$0xf]
        %v876 = vld [vmem:[%s4 + $0x1c4] sm:$0xf]
        %v877 = vld [vmem:[%s4 + $0x1c8] sm:$0xf]
        %v878 = vld [vmem:[%s4 + $0x1cc] sm:$0xf]
        %v879 = vld [vmem:[%s4 + $0x1d0] sm:$0xf]
        %v880 = vld [vmem:[%s4 + $0x1d4] sm:$0xf]
        %v881 = vld [vmem:[%s4 + $0x1d8] sm:$0xf]
        %v882 = vld [vmem:[%s4 + $0x1dc] sm:$0xf]
        %v883 = vld [vmem:[%s4 + $0x1e0] sm:$0xf]
        %v884 = vld [vmem:[%s4 + $0x1e4] sm:$0xf]
        %v885 = vld [vmem:[%s4 + $0x1e8] sm:$0xf]
        %v886 = vld [vmem:[%s4 + $0x1ec] sm:$0xf]
        %v887 = vld [vmem:[%s4 + $0x1f0] sm:$0xf]
        %v888 = vld [vmem:[%s4 + $0x1f4] sm:$0xf]
        %v889 = vld [vmem:[%s4 + $0x1f8] sm:$0xf]
        %v890 = vld [vmem:[%s4 + $0x1fc] sm:$0xf]
        %v891 = vld [vmem:[%s5] sm:$0x1]
        %v893 = vlaneseq
        %v894 = vshrl.u32 %v893, 7
        %v895 = vsub.s32 0, %v894
        %v896 = vrot.slane %v891, %v895
        %v902 = vunpack.c.l.b16 %v759
        %v903 = vunpack.c.h.b16 %v759
        %v904 = vunpack.c.l.b16 %v760
        %v905 = vunpack.c.h.b16 %v760
        %v906 = vunpack.c.l.b16 %v761
        %v907 = vunpack.c.h.b16 %v761
        %v908 = vunpack.c.l.b16 %v762
        %v909 = vunpack.c.h.b16 %v762
        %v910 = vpack.c.b16 %v902, %v902
        %v911 = vpack.c.b16 %v903, %v903
        %v912 = vpack.c.b16 %v904, %v904
        %v913 = vpack.c.b16 %v905, %v905
        %v914 = vpack.c.b16 %v906, %v906
        %v915 = vpack.c.b16 %v907, %v907
        %v916 = vpack.c.b16 %v908, %v908
        %v917 = vpack.c.b16 %v909, %v909
        %v1054 = vunpack.c.l.b16 %v763
        %v1055 = vunpack.c.l.b16 %v764
        %v1056 = vunpack.c.l.b16 %v765
        %v1057 = vunpack.c.l.b16 %v766
        %v1058 = vunpack.c.l.b16 %v767
        %v1059 = vunpack.c.l.b16 %v768
        %v1060 = vunpack.c.l.b16 %v769
        %v1061 = vunpack.c.l.b16 %v770
        %v1062 = vunpack.c.l.b16 %v771
        %v1063 = vunpack.c.l.b16 %v772
        %v1064 = vunpack.c.l.b16 %v773
        %v1065 = vunpack.c.l.b16 %v774
        %v1066 = vunpack.c.l.b16 %v775
        %v1067 = vunpack.c.l.b16 %v776
        %v1068 = vunpack.c.l.b16 %v777
        %v1069 = vunpack.c.l.b16 %v778
        %v1070 = vunpack.c.l.b16 %v779
        %v1071 = vunpack.c.l.b16 %v780
        %v1072 = vunpack.c.l.b16 %v781
        %v1073 = vunpack.c.l.b16 %v782
        %v1074 = vunpack.c.l.b16 %v783
        %v1075 = vunpack.c.l.b16 %v784
        %v1076 = vunpack.c.l.b16 %v785
        %v1077 = vunpack.c.l.b16 %v786
        %v1078 = vunpack.c.l.b16 %v787
        %v1079 = vunpack.c.l.b16 %v788
        %v1080 = vunpack.c.l.b16 %v789
        %v1081 = vunpack.c.l.b16 %v790
        %v1082 = vunpack.c.l.b16 %v791
        %v1083 = vunpack.c.l.b16 %v792
        %v1084 = vunpack.c.l.b16 %v793
        %v1085 = vunpack.c.l.b16 %v794
        %v1086 = vunpack.c.l.b16 %v795
        %v1087 = vunpack.c.l.b16 %v796
        %v1088 = vunpack.c.l.b16 %v797
        %v1089 = vunpack.c.l.b16 %v798
        %v1090 = vunpack.c.l.b16 %v799
        %v1091 = vunpack.c.l.b16 %v800
        %v1092 = vunpack.c.l.b16 %v801
        %v1093 = vunpack.c.l.b16 %v802
        %v1094 = vunpack.c.l.b16 %v803
        %v1095 = vunpack.c.l.b16 %v804
        %v1096 = vunpack.c.l.b16 %v805
        %v1097 = vunpack.c.l.b16 %v806
        %v1098 = vunpack.c.l.b16 %v807
        %v1099 = vunpack.c.l.b16 %v808
        %v1100 = vunpack.c.l.b16 %v809
        %v1101 = vunpack.c.l.b16 %v810
        %v1102 = vunpack.c.l.b16 %v811
        %v1103 = vunpack.c.l.b16 %v812
        %v1104 = vunpack.c.l.b16 %v813
        %v1105 = vunpack.c.l.b16 %v814
        %v1106 = vunpack.c.l.b16 %v815
        %v1107 = vunpack.c.l.b16 %v816
        %v1108 = vunpack.c.l.b16 %v817
        %v1109 = vunpack.c.l.b16 %v818
        %v1110 = vunpack.c.l.b16 %v819
        %v1111 = vunpack.c.l.b16 %v820
        %v1112 = vunpack.c.l.b16 %v821
        %v1113 = vunpack.c.l.b16 %v822
        %v1114 = vunpack.c.l.b16 %v823
        %v1115 = vunpack.c.l.b16 %v824
        %v1116 = vunpack.c.l.b16 %v825
        %v1117 = vunpack.c.l.b16 %v826
        %v1118 = vunpack.c.l.b16 %v827
        %v1119 = vunpack.c.l.b16 %v828
        %v1120 = vunpack.c.l.b16 %v829
        %v1121 = vunpack.c.l.b16 %v830
        %v1122 = vunpack.c.l.b16 %v831
        %v1123 = vunpack.c.l.b16 %v832
        %v1124 = vunpack.c.l.b16 %v833
        %v1125 = vunpack.c.l.b16 %v834
        %v1126 = vunpack.c.l.b16 %v835
        %v1127 = vunpack.c.l.b16 %v836
        %v1128 = vunpack.c.l.b16 %v837
        %v1129 = vunpack.c.l.b16 %v838
        %v1130 = vunpack.c.l.b16 %v839
        %v1131 = vunpack.c.l.b16 %v840
        %v1132 = vunpack.c.l.b16 %v841
        %v1133 = vunpack.c.l.b16 %v842
        %v1134 = vunpack.c.l.b16 %v843
        %v1135 = vunpack.c.l.b16 %v844
        %v1136 = vunpack.c.l.b16 %v845
        %v1137 = vunpack.c.l.b16 %v846
        %v1138 = vunpack.c.l.b16 %v847
        %v1139 = vunpack.c.l.b16 %v848
        %v1140 = vunpack.c.l.b16 %v849
        %v1141 = vunpack.c.l.b16 %v850
        %v1142 = vunpack.c.l.b16 %v851
        %v1143 = vunpack.c.l.b16 %v852
        %v1144 = vunpack.c.l.b16 %v853
        %v1145 = vunpack.c.l.b16 %v854
        %v1146 = vunpack.c.l.b16 %v855
        %v1147 = vunpack.c.l.b16 %v856
        %v1148 = vunpack.c.l.b16 %v857
        %v1149 = vunpack.c.l.b16 %v858
        %v1150 = vunpack.c.l.b16 %v859
        %v1151 = vunpack.c.l.b16 %v860
        %v1152 = vunpack.c.l.b16 %v861
        %v1153 = vunpack.c.l.b16 %v862
        %v1154 = vunpack.c.l.b16 %v863
        %v1155 = vunpack.c.l.b16 %v864
        %v1156 = vunpack.c.l.b16 %v865
        %v1157 = vunpack.c.l.b16 %v866
        %v1158 = vunpack.c.l.b16 %v867
        %v1159 = vunpack.c.l.b16 %v868
        %v1160 = vunpack.c.l.b16 %v869
        %v1161 = vunpack.c.l.b16 %v870
        %v1162 = vunpack.c.l.b16 %v871
        %v1163 = vunpack.c.l.b16 %v872
        %v1164 = vunpack.c.l.b16 %v873
        %v1165 = vunpack.c.l.b16 %v874
        %v1166 = vunpack.c.l.b16 %v875
        %v1167 = vunpack.c.l.b16 %v876
        %v1168 = vunpack.c.l.b16 %v877
        %v1169 = vunpack.c.l.b16 %v878
        %v1170 = vunpack.c.l.b16 %v879
        %v1171 = vunpack.c.l.b16 %v880
        %v1172 = vunpack.c.l.b16 %v881
        %v1173 = vunpack.c.l.b16 %v882
        %v1174 = vunpack.c.l.b16 %v883
        %v1175 = vunpack.c.l.b16 %v884
        %v1176 = vunpack.c.l.b16 %v885
        %v1177 = vunpack.c.l.b16 %v886
        %v1178 = vunpack.c.l.b16 %v887
        %v1179 = vunpack.c.l.b16 %v888
        %v1180 = vunpack.c.l.b16 %v889
        %v1181 = vunpack.c.l.b16 %v890
        %v1182 = vpack.c.b16 %v1055, %v1054
        %v1183 = vpack.c.b16 %v1057, %v1056
        %v1184 = vpack.c.b16 %v1059, %v1058
        %v1185 = vpack.c.b16 %v1061, %v1060
        %v1186 = vpack.c.b16 %v1063, %v1062
        %v1187 = vpack.c.b16 %v1065, %v1064
        %v1188 = vpack.c.b16 %v1067, %v1066
        %v1189 = vpack.c.b16 %v1069, %v1068
        %v1190 = vpack.c.b16 %v1071, %v1070
        %v1191 = vpack.c.b16 %v1073, %v1072
        %v1192 = vpack.c.b16 %v1075, %v1074
        %v1193 = vpack.c.b16 %v1077, %v1076
        %v1194 = vpack.c.b16 %v1079, %v1078
        %v1195 = vpack.c.b16 %v1081, %v1080
        %v1196 = vpack.c.b16 %v1083, %v1082
        %v1197 = vpack.c.b16 %v1085, %v1084
        %v1198 = vpack.c.b16 %v1087, %v1086
        %v1199 = vpack.c.b16 %v1089, %v1088
        %v1200 = vpack.c.b16 %v1091, %v1090
        %v1201 = vpack.c.b16 %v1093, %v1092
        %v1202 = vpack.c.b16 %v1095, %v1094
        %v1203 = vpack.c.b16 %v1097, %v1096
        %v1204 = vpack.c.b16 %v1099, %v1098
        %v1205 = vpack.c.b16 %v1101, %v1100
        %v1206 = vpack.c.b16 %v1103, %v1102
        %v1207 = vpack.c.b16 %v1105, %v1104
        %v1208 = vpack.c.b16 %v1107, %v1106
        %v1209 = vpack.c.b16 %v1109, %v1108
        %v1210 = vpack.c.b16 %v1111, %v1110
        %v1211 = vpack.c.b16 %v1113, %v1112
        %v1212 = vpack.c.b16 %v1115, %v1114
        %v1213 = vpack.c.b16 %v1117, %v1116
        %v1214 = vpack.c.b16 %v1119, %v1118
        %v1215 = vpack.c.b16 %v1121, %v1120
        %v1216 = vpack.c.b16 %v1123, %v1122
        %v1217 = vpack.c.b16 %v1125, %v1124
        %v1218 = vpack.c.b16 %v1127, %v1126
        %v1219 = vpack.c.b16 %v1129, %v1128
        %v1220 = vpack.c.b16 %v1131, %v1130
        %v1221 = vpack.c.b16 %v1133, %v1132
        %v1222 = vpack.c.b16 %v1135, %v1134
        %v1223 = vpack.c.b16 %v1137, %v1136
        %v1224 = vpack.c.b16 %v1139, %v1138
        %v1225 = vpack.c.b16 %v1141, %v1140
        %v1226 = vpack.c.b16 %v1143, %v1142
        %v1227 = vpack.c.b16 %v1145, %v1144
        %v1228 = vpack.c.b16 %v1147, %v1146
        %v1229 = vpack.c.b16 %v1149, %v1148
        %v1230 = vpack.c.b16 %v1151, %v1150
        %v1231 = vpack.c.b16 %v1153, %v1152
        %v1232 = vpack.c.b16 %v1155, %v1154
        %v1233 = vpack.c.b16 %v1157, %v1156
        %v1234 = vpack.c.b16 %v1159, %v1158
        %v1235 = vpack.c.b16 %v1161, %v1160
        %v1236 = vpack.c.b16 %v1163, %v1162
        %v1237 = vpack.c.b16 %v1165, %v1164
        %v1238 = vpack.c.b16 %v1167, %v1166
        %v1239 = vpack.c.b16 %v1169, %v1168
        %v1240 = vpack.c.b16 %v1171, %v1170
        %v1241 = vpack.c.b16 %v1173, %v1172
        %v1242 = vpack.c.b16 %v1175, %v1174
        %v1243 = vpack.c.b16 %v1177, %v1176
        %v1244 = vpack.c.b16 %v1179, %v1178
        %v1245 = vpack.c.b16 %v1181, %v1180
        %1310 = vmatprep.subr.bf16.mxu0 0
        %1311 = vmatpush1.bf16.msra.mxu0 %v1182
        %1312 = vmatprep.subr.bf16.mxu0 0
        %1313 = vmatpush1.bf16.msra.mxu0 %v1183
        %1314 = vmatprep.subr.bf16.mxu0 0
        %1315 = vmatpush1.bf16.msra.mxu0 %v1184
        %1316 = vmatprep.subr.bf16.mxu0 0
        %1317 = vmatpush1.bf16.msra.mxu0 %v1185
        %1318 = vmatprep.subr.bf16.mxu0 0
        %1319 = vmatpush1.bf16.msra.mxu0 %v1186
        %1320 = vmatprep.subr.bf16.mxu0 0
        %1321 = vmatpush1.bf16.msra.mxu0 %v1187
        %1322 = vmatprep.subr.bf16.mxu0 0
        %1323 = vmatpush1.bf16.msra.mxu0 %v1188
        %1324 = vmatprep.subr.bf16.mxu0 0
        %1325 = vmatpush1.bf16.msra.mxu0 %v1189
        %1326 = vmatprep.subr.bf16.mxu0 0
        %1327 = vmatpush1.bf16.msra.mxu0 %v1190
        %1328 = vmatprep.subr.bf16.mxu0 0
        %1329 = vmatpush1.bf16.msra.mxu0 %v1191
        %1330 = vmatprep.subr.bf16.mxu0 0
        %1331 = vmatpush1.bf16.msra.mxu0 %v1192
        %1332 = vmatprep.subr.bf16.mxu0 0
        %1333 = vmatpush1.bf16.msra.mxu0 %v1193
        %1334 = vmatprep.subr.bf16.mxu0 0
        %1335 = vmatpush1.bf16.msra.mxu0 %v1194
        %1336 = vmatprep.subr.bf16.mxu0 0
        %1337 = vmatpush1.bf16.msra.mxu0 %v1195
        %1338 = vmatprep.subr.bf16.mxu0 0
        %1339 = vmatpush1.bf16.msra.mxu0 %v1196
        %1340 = vmatprep.subr.bf16.mxu0 0
        %1341 = vmatpush1.bf16.msra.mxu0 %v1197
        %1342 = vmatprep.mubr.bf16.mxu0 %v911
        %1343 = vmatmul.mubr.bf16.gmra.mrb[0].mxu0 %v910
        %v1344 = vpop.f32.mrb[0].mxu0
        %v1345 = vadd.f32 %v896, %v1344
        %v1346 = vpop.f32.mrb[0].mxu0
        %v1347 = vpop.f32.mrb[0].mxu0
        %v1348 = vpop.f32.mrb[0].mxu0
        %1349 = vdwg.mxu0
        %1350 = vmatprep.subr.bf16.mxu0 0
        %1351 = vmatpush1.bf16.msra.mxu0 %v1198
        %1352 = vmatprep.subr.bf16.mxu0 0
        %1353 = vmatpush1.bf16.msra.mxu0 %v1199
        %1354 = vmatprep.subr.bf16.mxu0 0
        %1355 = vmatpush1.bf16.msra.mxu0 %v1200
        %1356 = vmatprep.subr.bf16.mxu0 0
        %1357 = vmatpush1.bf16.msra.mxu0 %v1201
        %1358 = vmatprep.subr.bf16.mxu0 0
        %1359 = vmatpush1.bf16.msra.mxu0 %v1202
        %1360 = vmatprep.subr.bf16.mxu0 0
        %1361 = vmatpush1.bf16.msra.mxu0 %v1203
        %1362 = vmatprep.subr.bf16.mxu0 0
        %1363 = vmatpush1.bf16.msra.mxu0 %v1204
        %1364 = vmatprep.subr.bf16.mxu0 0
        %1365 = vmatpush1.bf16.msra.mxu0 %v1205
        %1366 = vmatprep.subr.bf16.mxu0 0
        %1367 = vmatpush1.bf16.msra.mxu0 %v1206
        %1368 = vmatprep.subr.bf16.mxu0 0
        %1369 = vmatpush1.bf16.msra.mxu0 %v1207
        %1370 = vmatprep.subr.bf16.mxu0 0
        %1371 = vmatpush1.bf16.msra.mxu0 %v1208
        %1372 = vmatprep.subr.bf16.mxu0 0
        %1373 = vmatpush1.bf16.msra.mxu0 %v1209
        %1374 = vmatprep.subr.bf16.mxu0 0
        %1375 = vmatpush1.bf16.msra.mxu0 %v1210
        %1376 = vmatprep.subr.bf16.mxu0 0
        %1377 = vmatpush1.bf16.msra.mxu0 %v1211
        %1378 = vmatprep.subr.bf16.mxu0 0
        %1379 = vmatpush1.bf16.msra.mxu0 %v1212
        %1380 = vmatprep.subr.bf16.mxu0 0
        %1381 = vmatpush1.bf16.msra.mxu0 %v1213
        %1382 = vmatprep.mubr.bf16.mxu0 %v913
        %1383 = vmatmul.mubr.bf16.gmra.mrb[0].mxu0 %v912
        %v1384 = vpop.f32.mrb[0].mxu0
        %v1385 = vadd.f32 %v1345, %v1384
        %v1386 = vpop.f32.mrb[0].mxu0
        %v1387 = vpop.f32.mrb[0].mxu0
        %v1388 = vpop.f32.mrb[0].mxu0
        %1389 = vdwg.mxu0
        %1390 = vmatprep.subr.bf16.mxu0 0
        %1391 = vmatpush1.bf16.msra.mxu0 %v1214
        %1392 = vmatprep.subr.bf16.mxu0 0
        %1393 = vmatpush1.bf16.msra.mxu0 %v1215
        %1394 = vmatprep.subr.bf16.mxu0 0
        %1395 = vmatpush1.bf16.msra.mxu0 %v1216
        %1396 = vmatprep.subr.bf16.mxu0 0
        %1397 = vmatpush1.bf16.msra.mxu0 %v1217
        %1398 = vmatprep.subr.bf16.mxu0 0
        %1399 = vmatpush1.bf16.msra.mxu0 %v1218
        %1400 = vmatprep.subr.bf16.mxu0 0
        %1401 = vmatpush1.bf16.msra.mxu0 %v1219
        %1402 = vmatprep.subr.bf16.mxu0 0
        %1403 = vmatpush1.bf16.msra.mxu0 %v1220
        %1404 = vmatprep.subr.bf16.mxu0 0
        %1405 = vmatpush1.bf16.msra.mxu0 %v1221
        %1406 = vmatprep.subr.bf16.mxu0 0
        %1407 = vmatpush1.bf16.msra.mxu0 %v1222
        %1408 = vmatprep.subr.bf16.mxu0 0
        %1409 = vmatpush1.bf16.msra.mxu0 %v1223
        %1410 = vmatprep.subr.bf16.mxu0 0
        %1411 = vmatpush1.bf16.msra.mxu0 %v1224
        %1412 = vmatprep.subr.bf16.mxu0 0
        %1413 = vmatpush1.bf16.msra.mxu0 %v1225
        %1414 = vmatprep.subr.bf16.mxu0 0
        %1415 = vmatpush1.bf16.msra.mxu0 %v1226
        %1416 = vmatprep.subr.bf16.mxu0 0
        %1417 = vmatpush1.bf16.msra.mxu0 %v1227
        %1418 = vmatprep.subr.bf16.mxu0 0
        %1419 = vmatpush1.bf16.msra.mxu0 %v1228
        %1420 = vmatprep.subr.bf16.mxu0 0
        %1421 = vmatpush1.bf16.msra.mxu0 %v1229
        %1422 = vmatprep.mubr.bf16.mxu0 %v915
        %1423 = vmatmul.mubr.bf16.gmra.mrb[0].mxu0 %v914
        %v1424 = vpop.f32.mrb[0].mxu0
        %v1425 = vadd.f32 %v1385, %v1424
        %v1426 = vpop.f32.mrb[0].mxu0
        %v1427 = vpop.f32.mrb[0].mxu0
        %v1428 = vpop.f32.mrb[0].mxu0
        %1429 = vdwg.mxu0
        %1430 = vmatprep.subr.bf16.mxu0 0
        %1431 = vmatpush1.bf16.msra.mxu0 %v1230
        %1432 = vmatprep.subr.bf16.mxu0 0
        %1433 = vmatpush1.bf16.msra.mxu0 %v1231
        %1434 = vmatprep.subr.bf16.mxu0 0
        %1435 = vmatpush1.bf16.msra.mxu0 %v1232
        %1436 = vmatprep.subr.bf16.mxu0 0
        %1437 = vmatpush1.bf16.msra.mxu0 %v1233
        %1438 = vmatprep.subr.bf16.mxu0 0
        %1439 = vmatpush1.bf16.msra.mxu0 %v1234
        %1440 = vmatprep.subr.bf16.mxu0 0
        %1441 = vmatpush1.bf16.msra.mxu0 %v1235
        %1442 = vmatprep.subr.bf16.mxu0 0
        %1443 = vmatpush1.bf16.msra.mxu0 %v1236
        %1444 = vmatprep.subr.bf16.mxu0 0
        %1445 = vmatpush1.bf16.msra.mxu0 %v1237
        %1446 = vmatprep.subr.bf16.mxu0 0
        %1447 = vmatpush1.bf16.msra.mxu0 %v1238
        %1448 = vmatprep.subr.bf16.mxu0 0
        %1449 = vmatpush1.bf16.msra.mxu0 %v1239
        %1450 = vmatprep.subr.bf16.mxu0 0
        %1451 = vmatpush1.bf16.msra.mxu0 %v1240
        %1452 = vmatprep.subr.bf16.mxu0 0
        %1453 = vmatpush1.bf16.msra.mxu0 %v1241
        %1454 = vmatprep.subr.bf16.mxu0 0
        %1455 = vmatpush1.bf16.msra.mxu0 %v1242
        %1456 = vmatprep.subr.bf16.mxu0 0
        %1457 = vmatpush1.bf16.msra.mxu0 %v1243
        %1458 = vmatprep.subr.bf16.mxu0 0
        %1459 = vmatpush1.bf16.msra.mxu0 %v1244
        %1460 = vmatprep.subr.bf16.mxu0 0
        %1461 = vmatpush1.bf16.msra.mxu0 %v1245
        %1462 = vmatprep.mubr.bf16.mxu0 %v917
        %1463 = vmatmul.mubr.bf16.gmra.mrb[0].mxu0 %v916
        %v1464 = vpop.f32.mrb[0].mxu0
        %v1465 = vadd.f32 %v1425, %v1464
        %v1466 = vpop.f32.mrb[0].mxu0
        %v1467 = vpop.f32.mrb[0].mxu0
        %v1468 = vpop.f32.mrb[0].mxu0
        %1469 = vdwg.mxu0
        %v1470 = vmax.f32 %v1465, 0.0
        %v1471 = vpack.c.bf16 %v1470, %v1470
        %v1472 = vld [vmem:[%s6] sm:$0xff]
        %v1473 = vld [vmem:[%s6 + $0x8] sm:$0xff]
        %v1474 = vld [vmem:[%s6 + $0x10] sm:$0xff]
        %v1475 = vld [vmem:[%s6 + $0x18] sm:$0xff]
        %v1476 = vld [vmem:[%s6 + $0x20] sm:$0xff]
        %v1477 = vld [vmem:[%s6 + $0x28] sm:$0xff]
        %v1478 = vld [vmem:[%s6 + $0x30] sm:$0xff]
        %v1479 = vld [vmem:[%s6 + $0x38] sm:$0xff]
        %v1480 = vld [vmem:[%s6 + $0x40] sm:$0xff]
        %v1481 = vld [vmem:[%s6 + $0x48] sm:$0xff]
        %v1482 = vld [vmem:[%s6 + $0x50] sm:$0xff]
        %v1483 = vld [vmem:[%s6 + $0x58] sm:$0xff]
        %v1484 = vld [vmem:[%s6 + $0x60] sm:$0xff]
        %v1485 = vld [vmem:[%s6 + $0x68] sm:$0xff]
        %v1486 = vld [vmem:[%s6 + $0x70] sm:$0xff]
        %v1487 = vld [vmem:[%s6 + $0x78] sm:$0xff]
        %v1488 = vld [vmem:[%s7] sm:$0x3]
        %v1490 = vlaneseq
        %v1491 = vshrl.u32 %v1490, 7
        %v1492 = vsub.s32 0, %v1491
        %v1493 = vrot.slane %v1488, %v1492
        %v1494 = vlaneseq
        %v1495 = vshrl.u32 %v1494, 7
        %v1496 = vsub.s32 1, %v1495
        %v1497 = vrot.slane %v1488, %v1496
        %v1516 = vunpack.c.l.b16 %v1472
        %v1517 = vunpack.c.h.b16 %v1472
        %v1518 = vunpack.c.l.b16 %v1473
        %v1519 = vunpack.c.h.b16 %v1473
        %v1520 = vunpack.c.l.b16 %v1474
        %v1521 = vunpack.c.h.b16 %v1474
        %v1522 = vunpack.c.l.b16 %v1475
        %v1523 = vunpack.c.h.b16 %v1475
        %v1524 = vunpack.c.l.b16 %v1476
        %v1525 = vunpack.c.h.b16 %v1476
        %v1526 = vunpack.c.l.b16 %v1477
        %v1527 = vunpack.c.h.b16 %v1477
        %v1528 = vunpack.c.l.b16 %v1478
        %v1529 = vunpack.c.h.b16 %v1478
        %v1530 = vunpack.c.l.b16 %v1479
        %v1531 = vunpack.c.h.b16 %v1479
        %v1532 = vunpack.c.l.b16 %v1480
        %v1533 = vunpack.c.h.b16 %v1480
        %v1534 = vunpack.c.l.b16 %v1481
        %v1535 = vunpack.c.h.b16 %v1481
        %v1536 = vunpack.c.l.b16 %v1482
        %v1537 = vunpack.c.h.b16 %v1482
        %v1538 = vunpack.c.l.b16 %v1483
        %v1539 = vunpack.c.h.b16 %v1483
        %v1540 = vunpack.c.l.b16 %v1484
        %v1541 = vunpack.c.h.b16 %v1484
        %v1542 = vunpack.c.l.b16 %v1485
        %v1543 = vunpack.c.h.b16 %v1485
        %v1544 = vunpack.c.l.b16 %v1486
        %v1545 = vunpack.c.h.b16 %v1486
        %v1546 = vunpack.c.l.b16 %v1487
        %v1547 = vunpack.c.h.b16 %v1487
        %v1548 = vpack.c.b16 %v1518, %v1516
        %v1549 = vpack.c.b16 %v1519, %v1517
        %v1550 = vpack.c.b16 %v1522, %v1520
        %v1551 = vpack.c.b16 %v1523, %v1521
        %v1552 = vpack.c.b16 %v1526, %v1524
        %v1553 = vpack.c.b16 %v1527, %v1525
        %v1554 = vpack.c.b16 %v1530, %v1528
        %v1555 = vpack.c.b16 %v1531, %v1529
        %v1556 = vpack.c.b16 %v1534, %v1532
        %v1557 = vpack.c.b16 %v1535, %v1533
        %v1558 = vpack.c.b16 %v1538, %v1536
        %v1559 = vpack.c.b16 %v1539, %v1537
        %v1560 = vpack.c.b16 %v1542, %v1540
        %v1561 = vpack.c.b16 %v1543, %v1541
        %v1562 = vpack.c.b16 %v1546, %v1544
        %v1563 = vpack.c.b16 %v1547, %v1545
        %1580 = vmatprep.subr.bf16.mxu0 %v1549
        %1581 = vmatpush1.bf16.msra.mxu0 %v1548
        %1582 = vmatprep.subr.bf16.mxu0 %v1551
        %1583 = vmatpush1.bf16.msra.mxu0 %v1550
        %1584 = vmatprep.subr.bf16.mxu0 %v1553
        %1585 = vmatpush1.bf16.msra.mxu0 %v1552
        %1586 = vmatprep.subr.bf16.mxu0 %v1555
        %1587 = vmatpush1.bf16.msra.mxu0 %v1554
        %1588 = vmatprep.subr.bf16.mxu0 %v1557
        %1589 = vmatpush1.bf16.msra.mxu0 %v1556
        %1590 = vmatprep.subr.bf16.mxu0 %v1559
        %1591 = vmatpush1.bf16.msra.mxu0 %v1558
        %1592 = vmatprep.subr.bf16.mxu0 %v1561
        %1593 = vmatpush1.bf16.msra.mxu0 %v1560
        %1594 = vmatprep.subr.bf16.mxu0 %v1563
        %1595 = vmatpush1.bf16.msra.mxu0 %v1562
        %1596 = vmatprep.subr.bf16.mxu0 0
        %1597 = vmatpush1.bf16.msra.mxu0 0
        %1598 = vmatprep.subr.bf16.mxu0 0
        %1599 = vmatpush1.bf16.msra.mxu0 0
        %1600 = vmatprep.subr.bf16.mxu0 0
        %1601 = vmatpush1.bf16.msra.mxu0 0
        %1602 = vmatprep.subr.bf16.mxu0 0
        %1603 = vmatpush1.bf16.msra.mxu0 0
        %1604 = vmatprep.subr.bf16.mxu0 0
        %1605 = vmatpush1.bf16.msra.mxu0 0
        %1606 = vmatprep.subr.bf16.mxu0 0
        %1607 = vmatpush1.bf16.msra.mxu0 0
        %1608 = vmatprep.subr.bf16.mxu0 0
        %1609 = vmatpush1.bf16.msra.mxu0 0
        %1610 = vmatprep.subr.bf16.mxu0 0
        %1611 = vmatpush1.bf16.msra.mxu0 0
        %1612 = vmatprep.mubr.bf16.mxu0 0
        %1613 = vmatmul.mubr.bf16.gmra.mrb[0].mxu0 %v1471
        %v1614 = vpop.f32.mrb[0].mxu0
        %v1615 = vadd.f32 %v1493, %v1614
        %v1616 = vpop.f32.mrb[0].mxu0
        %v1617 = vadd.f32 %v1497, %v1616
        %v1618 = vpop.f32.mrb[0].mxu0
        %v1619 = vpop.f32.mrb[0].mxu0
        %1620 = vdwg.mxu0
        %v1621 = vld [vmem:[%s739] sm:$0xf]
        %v1622 = vld [vmem:[%s8] sm:$0xf]
        %v1623 = vld [vmem:[%s8 + $0x4] sm:$0xf]
        %v1624 = vld [vmem:[%s8 + $0x8] sm:$0xf]
        %v1625 = vld [vmem:[%s8 + $0xc] sm:$0xf]
        %v1626 = vld [vmem:[%s8 + $0x10] sm:$0xf]
        %v1627 = vld [vmem:[%s8 + $0x14] sm:$0xf]
        %v1628 = vld [vmem:[%s8 + $0x18] sm:$0xf]
        %v1629 = vld [vmem:[%s8 + $0x1c] sm:$0xf]
        %v1630 = vld [vmem:[%s8 + $0x20] sm:$0xf]
        %v1631 = vld [vmem:[%s8 + $0x24] sm:$0xf]
        %v1632 = vld [vmem:[%s8 + $0x28] sm:$0xf]
        %v1633 = vld [vmem:[%s8 + $0x2c] sm:$0xf]
        %v1634 = vld [vmem:[%s8 + $0x30] sm:$0xf]
        %v1635 = vld [vmem:[%s8 + $0x34] sm:$0xf]
        %v1636 = vld [vmem:[%s8 + $0x38] sm:$0xf]
        %v1637 = vld [vmem:[%s8 + $0x3c] sm:$0xf]
        %v1638 = vld [vmem:[%s9] sm:$0x1]
        %v1640 = vlaneseq
        %v1641 = vshrl.u32 %v1640, 7
        %v1642 = vsub.s32 0, %v1641
        %v1643 = vrot.slane %v1638, %v1642
        %v1661 = vunpack.c.l.b16 %v1622
        %v1662 = vunpack.c.l.b16 %v1623
        %v1663 = vunpack.c.l.b16 %v1624
        %v1664 = vunpack.c.l.b16 %v1625
        %v1665 = vunpack.c.l.b16 %v1626
        %v1666 = vunpack.c.l.b16 %v1627
        %v1667 = vunpack.c.l.b16 %v1628
        %v1668 = vunpack.c.l.b16 %v1629
        %v1669 = vunpack.c.l.b16 %v1630
        %v1670 = vunpack.c.l.b16 %v1631
        %v1671 = vunpack.c.l.b16 %v1632
        %v1672 = vunpack.c.l.b16 %v1633
        %v1673 = vunpack.c.l.b16 %v1634
        %v1674 = vunpack.c.l.b16 %v1635
        %v1675 = vunpack.c.l.b16 %v1636
        %v1676 = vunpack.c.l.b16 %v1637
        %v1677 = vpack.c.b16 %v1662, %v1661
        %v1678 = vpack.c.b16 %v1664, %v1663
        %v1679 = vpack.c.b16 %v1666, %v1665
        %v1680 = vpack.c.b16 %v1668, %v1667
        %v1681 = vpack.c.b16 %v1670, %v1669
        %v1682 = vpack.c.b16 %v1672, %v1671
        %v1683 = vpack.c.b16 %v1674, %v1673
        %v1684 = vpack.c.b16 %v1676, %v1675
        %1693 = vmatprep.subr.bf16.mxu0 0
        %1694 = vmatpush1.bf16.msra.mxu0 %v1677
        %1695 = vmatprep.subr.bf16.mxu0 0
        %1696 = vmatpush1.bf16.msra.mxu0 %v1678
        %1697 = vmatprep.subr.bf16.mxu0 0
        %1698 = vmatpush1.bf16.msra.mxu0 %v1679
        %1699 = vmatprep.subr.bf16.mxu0 0
        %1700 = vmatpush1.bf16.msra.mxu0 %v1680
        %1701 = vmatprep.subr.bf16.mxu0 0
        %1702 = vmatpush1.bf16.msra.mxu0 %v1681
        %1703 = vmatprep.subr.bf16.mxu0 0
        %1704 = vmatpush1.bf16.msra.mxu0 %v1682
        %1705 = vmatprep.subr.bf16.mxu0 0
        %1706 = vmatpush1.bf16.msra.mxu0 %v1683
        %1707 = vmatprep.subr.bf16.mxu0 0
        %1708 = vmatpush1.bf16.msra.mxu0 %v1684
        %1709 = vmatprep.subr.bf16.mxu0 0
        %1710 = vmatpush1.bf16.msra.mxu0 0
        %1711 = vmatprep.subr.bf16.mxu0 0
        %1712 = vmatpush1.bf16.msra.mxu0 0
        %1713 = vmatprep.subr.bf16.mxu0 0
        %1714 = vmatpush1.bf16.msra.mxu0 0
        %1715 = vmatprep.subr.bf16.mxu0 0
        %1716 = vmatpush1.bf16.msra.mxu0 0
        %1717 = vmatprep.subr.bf16.mxu0 0
        %1718 = vmatpush1.bf16.msra.mxu0 0
        %1719 = vmatprep.subr.bf16.mxu0 0
        %1720 = vmatpush1.bf16.msra.mxu0 0
        %1721 = vmatprep.subr.bf16.mxu0 0
        %1722 = vmatpush1.bf16.msra.mxu0 0
        %1723 = vmatprep.subr.bf16.mxu0 0
        %1724 = vmatpush1.bf16.msra.mxu0 0
        %1725 = vmatprep.mubr.bf16.mxu0 0
        %1726 = vmatmul.mubr.bf16.gmra.mrb[0].mxu0 %v1621
        %v1727 = vpop.f32.mrb[0].mxu0
        %v1728 = vadd.f32 %v1643, %v1727
        %v1729 = vpop.f32.mrb[0].mxu0
        %v1730 = vpop.f32.mrb[0].mxu0
        %v1731 = vpop.f32.mrb[0].mxu0
        %1732 = vdwg.mxu0
        %v1733 = vmax.f32 %v1728, 0.0
        %v1734 = vpack.c.bf16 %v1733, %v1733
        %v1735 = vld [vmem:[%s10] sm:$0xff]
        %v1736 = vld [vmem:[%s10 + $0x8] sm:$0xff]
        %v1737 = vld [vmem:[%s10 + $0x10] sm:$0xff]
        %v1738 = vld [vmem:[%s10 + $0x18] sm:$0xff]
        %v1739 = vld [vmem:[%s10 + $0x20] sm:$0xff]
        %v1740 = vld [vmem:[%s10 + $0x28] sm:$0xff]
        %v1741 = vld [vmem:[%s10 + $0x30] sm:$0xff]
        %v1742 = vld [vmem:[%s10 + $0x38] sm:$0xff]
        %v1743 = vld [vmem:[%s10 + $0x40] sm:$0xff]
        %v1744 = vld [vmem:[%s10 + $0x48] sm:$0xff]
        %v1745 = vld [vmem:[%s10 + $0x50] sm:$0xff]
        %v1746 = vld [vmem:[%s10 + $0x58] sm:$0xff]
        %v1747 = vld [vmem:[%s10 + $0x60] sm:$0xff]
        %v1748 = vld [vmem:[%s10 + $0x68] sm:$0xff]
        %v1749 = vld [vmem:[%s10 + $0x70] sm:$0xff]
        %v1750 = vld [vmem:[%s10 + $0x78] sm:$0xff]
        %v1751 = vld [vmem:[%s11] sm:$0x3]
        %v1753 = vlaneseq
        %v1754 = vshrl.u32 %v1753, 7
        %v1755 = vsub.s32 0, %v1754
        %v1756 = vrot.slane %v1751, %v1755
        %v1757 = vlaneseq
        %v1758 = vshrl.u32 %v1757, 7
        %v1759 = vsub.s32 1, %v1758
        %v1760 = vrot.slane %v1751, %v1759
        %v1779 = vunpack.c.l.b16 %v1735
        %v1780 = vunpack.c.h.b16 %v1735
        %v1781 = vunpack.c.l.b16 %v1736
        %v1782 = vunpack.c.h.b16 %v1736
        %v1783 = vunpack.c.l.b16 %v1737
        %v1784 = vunpack.c.h.b16 %v1737
        %v1785 = vunpack.c.l.b16 %v1738
        %v1786 = vunpack.c.h.b16 %v1738
        %v1787 = vunpack.c.l.b16 %v1739
        %v1788 = vunpack.c.h.b16 %v1739
        %v1789 = vunpack.c.l.b16 %v1740
        %v1790 = vunpack.c.h.b16 %v1740
        %v1791 = vunpack.c.l.b16 %v1741
        %v1792 = vunpack.c.h.b16 %v1741
        %v1793 = vunpack.c.l.b16 %v1742
        %v1794 = vunpack.c.h.b16 %v1742
        %v1795 = vunpack.c.l.b16 %v1743
        %v1796 = vunpack.c.h.b16 %v1743
        %v1797 = vunpack.c.l.b16 %v1744
        %v1798 = vunpack.c.h.b16 %v1744
        %v1799 = vunpack.c.l.b16 %v1745
        %v1800 = vunpack.c.h.b16 %v1745
        %v1801 = vunpack.c.l.b16 %v1746
        %v1802 = vunpack.c.h.b16 %v1746
        %v1803 = vunpack.c.l.b16 %v1747
        %v1804 = vunpack.c.h.b16 %v1747
        %v1805 = vunpack.c.l.b16 %v1748
        %v1806 = vunpack.c.h.b16 %v1748
        %v1807 = vunpack.c.l.b16 %v1749
        %v1808 = vunpack.c.h.b16 %v1749
        %v1809 = vunpack.c.l.b16 %v1750
        %v1810 = vunpack.c.h.b16 %v1750
        %v1811 = vpack.c.b16 %v1781, %v1779
        %v1812 = vpack.c.b16 %v1782, %v1780
        %v1813 = vpack.c.b16 %v1785, %v1783
        %v1814 = vpack.c.b16 %v1786, %v1784
        %v1815 = vpack.c.b16 %v1789, %v1787
        %v1816 = vpack.c.b16 %v1790, %v1788
        %v1817 = vpack.c.b16 %v1793, %v1791
        %v1818 = vpack.c.b16 %v1794, %v1792
        %v1819 = vpack.c.b16 %v1797, %v1795
        %v1820 = vpack.c.b16 %v1798, %v1796
        %v1821 = vpack.c.b16 %v1801, %v1799
        %v1822 = vpack.c.b16 %v1802, %v1800
        %v1823 = vpack.c.b16 %v1805, %v1803
        %v1824 = vpack.c.b16 %v1806, %v1804
        %v1825 = vpack.c.b16 %v1809, %v1807
        %v1826 = vpack.c.b16 %v1810, %v1808
        %1843 = vmatprep.subr.bf16.mxu0 %v1812
        %1844 = vmatpush1.bf16.msra.mxu0 %v1811
        %1845 = vmatprep.subr.bf16.mxu0 %v1814
        %1846 = vmatpush1.bf16.msra.mxu0 %v1813
        %1847 = vmatprep.subr.bf16.mxu0 %v1816
        %1848 = vmatpush1.bf16.msra.mxu0 %v1815
        %1849 = vmatprep.subr.bf16.mxu0 %v1818
        %1850 = vmatpush1.bf16.msra.mxu0 %v1817
        %1851 = vmatprep.subr.bf16.mxu0 %v1820
        %1852 = vmatpush1.bf16.msra.mxu0 %v1819
        %1853 = vmatprep.subr.bf16.mxu0 %v1822
        %1854 = vmatpush1.bf16.msra.mxu0 %v1821
        %1855 = vmatprep.subr.bf16.mxu0 %v1824
        %1856 = vmatpush1.bf16.msra.mxu0 %v1823
        %1857 = vmatprep.subr.bf16.mxu0 %v1826
        %1858 = vmatpush1.bf16.msra.mxu0 %v1825
        %1859 = vmatprep.subr.bf16.mxu0 0
        %1860 = vmatpush1.bf16.msra.mxu0 0
        %1861 = vmatprep.subr.bf16.mxu0 0
        %1862 = vmatpush1.bf16.msra.mxu0 0
        %1863 = vmatprep.subr.bf16.mxu0 0
        %1864 = vmatpush1.bf16.msra.mxu0 0
        %1865 = vmatprep.subr.bf16.mxu0 0
        %1866 = vmatpush1.bf16.msra.mxu0 0
        %1867 = vmatprep.subr.bf16.mxu0 0
        %1868 = vmatpush1.bf16.msra.mxu0 0
        %1869 = vmatprep.subr.bf16.mxu0 0
        %1870 = vmatpush1.bf16.msra.mxu0 0
        %1871 = vmatprep.subr.bf16.mxu0 0
        %1872 = vmatpush1.bf16.msra.mxu0 0
        %1873 = vmatprep.subr.bf16.mxu0 0
        %1874 = vmatpush1.bf16.msra.mxu0 0
        %1875 = vmatprep.mubr.bf16.mxu0 0
        %1876 = vmatmul.mubr.bf16.gmra.mrb[0].mxu0 %v1734
        %v1877 = vpop.f32.mrb[0].mxu0
        %v1878 = vadd.f32 %v1756, %v1877
        %v1879 = vpop.f32.mrb[0].mxu0
        %v1880 = vadd.f32 %v1760, %v1879
        %v1881 = vpop.f32.mrb[0].mxu0
        %v1882 = vpop.f32.mrb[0].mxu0
        %1883 = vdwg.mxu0
        %v1884 = vlaneseq
        %v1885 = vand.u32 %v1884, 127
        %vm1886 = vcmp.lt.s32.totalorder %v1885, 16
        %v1887 = vsel %vm1886, %v1615, %v1878
        %1888 = vst [vmem:[%s757] sm:$0xff] %v1887
        %v1889 = vsel %vm1886, %v1617, %v1880
        %1890 = vst [vmem:[%s757 + $0x8] sm:$0xff] %v1889
        %v1891 = vld [vmem:[%s743] sm:$0xff]
        %v1892 = vmul.f32 %v1617, 0.5
        %v1893 = vmul.f32 %v1892, 1.442695
        %v1894 = vpow.pop %v1893
        %v1895 = vmul.f32 %v1891, %v1894
        %v1896 = vadd.f32 %v1895, %v1615
        %v1897 = vld [vmem:[%s747] sm:$0xff]
        %v1898 = vmul.f32 %v1880, 0.5
        %v1899 = vmul.f32 %v1898, 1.442695
        %v1900 = vpow.pop %v1899
        %v1901 = vmul.f32 %v1897, %v1900
        %v1902 = vadd.f32 %v1901, %v1878
        %v1903 = vpack.c.bf16 %v1896, %v1896
        %v1904 = vld [vmem:[%s12] sm:$0xf]
        %v1905 = vld [vmem:[%s12 + $0x4] sm:$0xf]
        %v1906 = vld [vmem:[%s12 + $0x8] sm:$0xf]
        %v1907 = vld [vmem:[%s12 + $0xc] sm:$0xf]
        %v1908 = vld [vmem:[%s12 + $0x10] sm:$0xf]
        %v1909 = vld [vmem:[%s12 + $0x14] sm:$0xf]
        %v1910 = vld [vmem:[%s12 + $0x18] sm:$0xf]
        %v1911 = vld [vmem:[%s12 + $0x1c] sm:$0xf]
        %v1912 = vld [vmem:[%s12 + $0x20] sm:$0xf]
        %v1913 = vld [vmem:[%s12 + $0x24] sm:$0xf]
        %v1914 = vld [vmem:[%s12 + $0x28] sm:$0xf]
        %v1915 = vld [vmem:[%s12 + $0x2c] sm:$0xf]
        %v1916 = vld [vmem:[%s12 + $0x30] sm:$0xf]
        %v1917 = vld [vmem:[%s12 + $0x34] sm:$0xf]
        %v1918 = vld [vmem:[%s12 + $0x38] sm:$0xf]
        %v1919 = vld [vmem:[%s12 + $0x3c] sm:$0xf]
        %v1920 = vld [vmem:[%s13] sm:$0x1]
        %v1922 = vlaneseq
        %v1923 = vshrl.u32 %v1922, 7
        %v1924 = vsub.s32 0, %v1923
        %v1925 = vrot.slane %v1920, %v1924
        %v1943 = vunpack.c.l.b16 %v1904
        %v1944 = vunpack.c.l.b16 %v1905
        %v1945 = vunpack.c.l.b16 %v1906
        %v1946 = vunpack.c.l.b16 %v1907
        %v1947 = vunpack.c.l.b16 %v1908
        %v1948 = vunpack.c.l.b16 %v1909
        %v1949 = vunpack.c.l.b16 %v1910
        %v1950 = vunpack.c.l.b16 %v1911
        %v1951 = vunpack.c.l.b16 %v1912
        %v1952 = vunpack.c.l.b16 %v1913
        %v1953 = vunpack.c.l.b16 %v1914
        %v1954 = vunpack.c.l.b16 %v1915
        %v1955 = vunpack.c.l.b16 %v1916
        %v1956 = vunpack.c.l.b16 %v1917
        %v1957 = vunpack.c.l.b16 %v1918
        %v1958 = vunpack.c.l.b16 %v1919
        %v1959 = vpack.c.b16 %v1944, %v1943
        %v1960 = vpack.c.b16 %v1946, %v1945
        %v1961 = vpack.c.b16 %v1948, %v1947
        %v1962 = vpack.c.b16 %v1950, %v1949
        %v1963 = vpack.c.b16 %v1952, %v1951
        %v1964 = vpack.c.b16 %v1954, %v1953
        %v1965 = vpack.c.b16 %v1956, %v1955
        %v1966 = vpack.c.b16 %v1958, %v1957
        %1975 = vmatprep.subr.bf16.mxu0 0
        %1976 = vmatpush1.bf16.msra.mxu0 %v1959
        %1977 = vmatprep.subr.bf16.mxu0 0
        %1978 = vmatpush1.bf16.msra.mxu0 %v1960
        %1979 = vmatprep.subr.bf16.mxu0 0
        %1980 = vmatpush1.bf16.msra.mxu0 %v1961
        %1981 = vmatprep.subr.bf16.mxu0 0
        %1982 = vmatpush1.bf16.msra.mxu0 %v1962
        %1983 = vmatprep.subr.bf16.mxu0 0
        %1984 = vmatpush1.bf16.msra.mxu0 %v1963
        %1985 = vmatprep.subr.bf16.mxu0 0
        %1986 = vmatpush1.bf16.msra.mxu0 %v1964
        %1987 = vmatprep.subr.bf16.mxu0 0
        %1988 = vmatpush1.bf16.msra.mxu0 %v1965
        %1989 = vmatprep.subr.bf16.mxu0 0
        %1990 = vmatpush1.bf16.msra.mxu0 %v1966
        %1991 = vmatprep.subr.bf16.mxu0 0
        %1992 = vmatpush1.bf16.msra.mxu0 0
        %1993 = vmatprep.subr.bf16.mxu0 0
        %1994 = vmatpush1.bf16.msra.mxu0 0
        %1995 = vmatprep.subr.bf16.mxu0 0
        %1996 = vmatpush1.bf16.msra.mxu0 0
        %1997 = vmatprep.subr.bf16.mxu0 0
        %1998 = vmatpush1.bf16.msra.mxu0 0
        %1999 = vmatprep.subr.bf16.mxu0 0
        %2000 = vmatpush1.bf16.msra.mxu0 0
        %2001 = vmatprep.subr.bf16.mxu0 0
        %2002 = vmatpush1.bf16.msra.mxu0 0
        %2003 = vmatprep.subr.bf16.mxu0 0
        %2004 = vmatpush1.bf16.msra.mxu0 0
        %2005 = vmatprep.subr.bf16.mxu0 0
        %2006 = vmatpush1.bf16.msra.mxu0 0
        %2007 = vmatprep.mubr.bf16.mxu0 0
        %2008 = vmatmul.mubr.bf16.gmra.mrb[0].mxu0 %v1903
        %v2009 = vpop.f32.mrb[0].mxu0
        %v2010 = vadd.f32 %v1925, %v2009
        %v2011 = vpop.f32.mrb[0].mxu0
        %v2012 = vpop.f32.mrb[0].mxu0
        %v2013 = vpop.f32.mrb[0].mxu0
        %2014 = vdwg.mxu0
        %v2015 = vmax.f32 %v2010, 0.0
        %v2016 = vpack.c.bf16 %v2015, %v2015
        %v2017 = vld [vmem:[%s14] sm:$0xff]
        %v2018 = vld [vmem:[%s14 + $0x8] sm:$0xff]
        %v2019 = vld [vmem:[%s14 + $0x10] sm:$0xff]
        %v2020 = vld [vmem:[%s14 + $0x18] sm:$0xff]
        %v2021 = vld [vmem:[%s14 + $0x20] sm:$0xff]
        %v2022 = vld [vmem:[%s14 + $0x28] sm:$0xff]
        %v2023 = vld [vmem:[%s14 + $0x30] sm:$0xff]
        %v2024 = vld [vmem:[%s14 + $0x38] sm:$0xff]
        %v2025 = vld [vmem:[%s14 + $0x40] sm:$0xff]
        %v2026 = vld [vmem:[%s14 + $0x48] sm:$0xff]
        %v2027 = vld [vmem:[%s14 + $0x50] sm:$0xff]
        %v2028 = vld [vmem:[%s14 + $0x58] sm:$0xff]
        %v2029 = vld [vmem:[%s14 + $0x60] sm:$0xff]
        %v2030 = vld [vmem:[%s14 + $0x68] sm:$0xff]
        %v2031 = vld [vmem:[%s14 + $0x70] sm:$0xff]
        %v2032 = vld [vmem:[%s14 + $0x78] sm:$0xff]
        %v2033 = vld [vmem:[%s14 + $0x80] sm:$0xff]
        %v2034 = vld [vmem:[%s14 + $0x88] sm:$0xff]
        %v2035 = vld [vmem:[%s14 + $0x90] sm:$0xff]
        %v2036 = vld [vmem:[%s14 + $0x98] sm:$0xff]
        %v2037 = vld [vmem:[%s14 + $0xa0] sm:$0xff]
        %v2038 = vld [vmem:[%s14 + $0xa8] sm:$0xff]
        %v2039 = vld [vmem:[%s14 + $0xb0] sm:$0xff]
        %v2040 = vld [vmem:[%s14 + $0xb8] sm:$0xff]
        %v2041 = vld [vmem:[%s14 + $0xc0] sm:$0xff]
        %v2042 = vld [vmem:[%s14 + $0xc8] sm:$0xff]
        %v2043 = vld [vmem:[%s14 + $0xd0] sm:$0xff]
        %v2044 = vld [vmem:[%s14 + $0xd8] sm:$0xff]
        %v2045 = vld [vmem:[%s14 + $0xe0] sm:$0xff]
        %v2046 = vld [vmem:[%s14 + $0xe8] sm:$0xff]
        %v2047 = vld [vmem:[%s14 + $0xf0] sm:$0xff]
        %v2048 = vld [vmem:[%s14 + $0xf8] sm:$0xff]
        %v2049 = vld [vmem:[%s14 + $0x100] sm:$0xff]
        %v2050 = vld [vmem:[%s14 + $0x108] sm:$0xff]
        %v2051 = vld [vmem:[%s14 + $0x110] sm:$0xff]
        %v2052 = vld [vmem:[%s14 + $0x118] sm:$0xff]
        %v2053 = vld [vmem:[%s14 + $0x120] sm:$0xff]
        %v2054 = vld [vmem:[%s14 + $0x128] sm:$0xff]
        %v2055 = vld [vmem:[%s14 + $0x130] sm:$0xff]
        %v2056 = vld [vmem:[%s14 + $0x138] sm:$0xff]
        %v2057 = vld [vmem:[%s14 + $0x140] sm:$0xff]
        %v2058 = vld [vmem:[%s14 + $0x148] sm:$0xff]
        %v2059 = vld [vmem:[%s14 + $0x150] sm:$0xff]
        %v2060 = vld [vmem:[%s14 + $0x158] sm:$0xff]
        %v2061 = vld [vmem:[%s14 + $0x160] sm:$0xff]
        %v2062 = vld [vmem:[%s14 + $0x168] sm:$0xff]
        %v2063 = vld [vmem:[%s14 + $0x170] sm:$0xff]
        %v2064 = vld [vmem:[%s14 + $0x178] sm:$0xff]
        %v2065 = vld [vmem:[%s14 + $0x180] sm:$0xff]
        %v2066 = vld [vmem:[%s14 + $0x188] sm:$0xff]
        %v2067 = vld [vmem:[%s14 + $0x190] sm:$0xff]
        %v2068 = vld [vmem:[%s14 + $0x198] sm:$0xff]
        %v2069 = vld [vmem:[%s14 + $0x1a0] sm:$0xff]
        %v2070 = vld [vmem:[%s14 + $0x1a8] sm:$0xff]
        %v2071 = vld [vmem:[%s14 + $0x1b0] sm:$0xff]
        %v2072 = vld [vmem:[%s14 + $0x1b8] sm:$0xff]
        %v2073 = vld [vmem:[%s14 + $0x1c0] sm:$0xff]
        %v2074 = vld [vmem:[%s14 + $0x1c8] sm:$0xff]
        %v2075 = vld [vmem:[%s14 + $0x1d0] sm:$0xff]
        %v2076 = vld [vmem:[%s14 + $0x1d8] sm:$0xff]
        %v2077 = vld [vmem:[%s14 + $0x1e0] sm:$0xff]
        %v2078 = vld [vmem:[%s14 + $0x1e8] sm:$0xff]
        %v2079 = vld [vmem:[%s14 + $0x1f0] sm:$0xff]
        %v2080 = vld [vmem:[%s14 + $0x1f8] sm:$0xff]
        %v2081 = vld [vmem:[%s15] sm:$0xff]
        %v2083 = vlaneseq
        %v2084 = vshrl.u32 %v2083, 7
        %v2085 = vsub.s32 0, %v2084
        %v2086 = vrot.slane %v2081, %v2085
        %v2087 = vlaneseq
        %v2088 = vshrl.u32 %v2087, 7
        %v2089 = vsub.s32 1, %v2088
        %v2090 = vrot.slane %v2081, %v2089
        %v2091 = vlaneseq
        %v2092 = vshrl.u32 %v2091, 7
        %v2093 = vsub.s32 2, %v2092
        %v2094 = vrot.slane %v2081, %v2093
        %v2095 = vlaneseq
        %v2096 = vshrl.u32 %v2095, 7
        %v2097 = vsub.s32 3, %v2096
        %v2098 = vrot.slane %v2081, %v2097
        %v2099 = vlaneseq
        %v2100 = vshrl.u32 %v2099, 7
        %v2101 = vsub.s32 4, %v2100
        %v2102 = vrot.slane %v2081, %v2101
        %v2103 = vlaneseq
        %v2104 = vshrl.u32 %v2103, 7
        %v2105 = vsub.s32 5, %v2104
        %v2106 = vrot.slane %v2081, %v2105
        %v2107 = vlaneseq
        %v2108 = vshrl.u32 %v2107, 7
        %v2109 = vsub.s32 6, %v2108
        %v2110 = vrot.slane %v2081, %v2109
        %v2111 = vlaneseq
        %v2112 = vshrl.u32 %v2111, 7
        %v2113 = vsub.s32 7, %v2112
        %v2114 = vrot.slane %v2081, %v2113
        %v2187 = vunpack.c.l.b16 %v2017
        %v2188 = vunpack.c.h.b16 %v2017
        %v2189 = vunpack.c.l.b16 %v2018
        %v2190 = vunpack.c.h.b16 %v2018
        %v2191 = vunpack.c.l.b16 %v2019
        %v2192 = vunpack.c.h.b16 %v2019
        %v2193 = vunpack.c.l.b16 %v2020
        %v2194 = vunpack.c.h.b16 %v2020
        %v2195 = vunpack.c.l.b16 %v2021
        %v2196 = vunpack.c.h.b16 %v2021
        %v2197 = vunpack.c.l.b16 %v2022
        %v2198 = vunpack.c.h.b16 %v2022
        %v2199 = vunpack.c.l.b16 %v2023
        %v2200 = vunpack.c.h.b16 %v2023
        %v2201 = vunpack.c.l.b16 %v2024
        %v2202 = vunpack.c.h.b16 %v2024
        %v2203 = vunpack.c.l.b16 %v2025
        %v2204 = vunpack.c.h.b16 %v2025
        %v2205 = vunpack.c.l.b16 %v2026
        %v2206 = vunpack.c.h.b16 %v2026
        %v2207 = vunpack.c.l.b16 %v2027
        %v2208 = vunpack.c.h.b16 %v2027
        %v2209 = vunpack.c.l.b16 %v2028
        %v2210 = vunpack.c.h.b16 %v2028
        %v2211 = vunpack.c.l.b16 %v2029
        %v2212 = vunpack.c.h.b16 %v2029
        %v2213 = vunpack.c.l.b16 %v2030
        %v2214 = vunpack.c.h.b16 %v2030
        %v2215 = vunpack.c.l.b16 %v2031
        %v2216 = vunpack.c.h.b16 %v2031
        %v2217 = vunpack.c.l.b16 %v2032
        %v2218 = vunpack.c.h.b16 %v2032
        %v2219 = vunpack.c.l.b16 %v2033
        %v2220 = vunpack.c.h.b16 %v2033
        %v2221 = vunpack.c.l.b16 %v2034
        %v2222 = vunpack.c.h.b16 %v2034
        %v2223 = vunpack.c.l.b16 %v2035
        %v2224 = vunpack.c.h.b16 %v2035
        %v2225 = vunpack.c.l.b16 %v2036
        %v2226 = vunpack.c.h.b16 %v2036
        %v2227 = vunpack.c.l.b16 %v2037
        %v2228 = vunpack.c.h.b16 %v2037
        %v2229 = vunpack.c.l.b16 %v2038
        %v2230 = vunpack.c.h.b16 %v2038
        %v2231 = vunpack.c.l.b16 %v2039
        %v2232 = vunpack.c.h.b16 %v2039
        %v2233 = vunpack.c.l.b16 %v2040
        %v2234 = vunpack.c.h.b16 %v2040
        %v2235 = vunpack.c.l.b16 %v2041
        %v2236 = vunpack.c.h.b16 %v2041
        %v2237 = vunpack.c.l.b16 %v2042
        %v2238 = vunpack.c.h.b16 %v2042
        %v2239 = vunpack.c.l.b16 %v2043
        %v2240 = vunpack.c.h.b16 %v2043
        %v2241 = vunpack.c.l.b16 %v2044
        %v2242 = vunpack.c.h.b16 %v2044
        %v2243 = vunpack.c.l.b16 %v2045
        %v2244 = vunpack.c.h.b16 %v2045
        %v2245 = vunpack.c.l.b16 %v2046
        %v2246 = vunpack.c.h.b16 %v2046
        %v2247 = vunpack.c.l.b16 %v2047
        %v2248 = vunpack.c.h.b16 %v2047
        %v2249 = vunpack.c.l.b16 %v2048
        %v2250 = vunpack.c.h.b16 %v2048
        %v2251 = vunpack.c.l.b16 %v2049
        %v2252 = vunpack.c.h.b16 %v2049
        %v2253 = vunpack.c.l.b16 %v2050
        %v2254 = vunpack.c.h.b16 %v2050
        %v2255 = vunpack.c.l.b16 %v2051
        %v2256 = vunpack.c.h.b16 %v2051
        %v2257 = vunpack.c.l.b16 %v2052
        %v2258 = vunpack.c.h.b16 %v2052
        %v2259 = vunpack.c.l.b16 %v2053
        %v2260 = vunpack.c.h.b16 %v2053
        %v2261 = vunpack.c.l.b16 %v2054
        %v2262 = vunpack.c.h.b16 %v2054
        %v2263 = vunpack.c.l.b16 %v2055
        %v2264 = vunpack.c.h.b16 %v2055
        %v2265 = vunpack.c.l.b16 %v2056
        %v2266 = vunpack.c.h.b16 %v2056
        %v2267 = vunpack.c.l.b16 %v2057
        %v2268 = vunpack.c.h.b16 %v2057
        %v2269 = vunpack.c.l.b16 %v2058
        %v2270 = vunpack.c.h.b16 %v2058
        %v2271 = vunpack.c.l.b16 %v2059
        %v2272 = vunpack.c.h.b16 %v2059
        %v2273 = vunpack.c.l.b16 %v2060
        %v2274 = vunpack.c.h.b16 %v2060
        %v2275 = vunpack.c.l.b16 %v2061
        %v2276 = vunpack.c.h.b16 %v2061
        %v2277 = vunpack.c.l.b16 %v2062
        %v2278 = vunpack.c.h.b16 %v2062
        %v2279 = vunpack.c.l.b16 %v2063
        %v2280 = vunpack.c.h.b16 %v2063
        %v2281 = vunpack.c.l.b16 %v2064
        %v2282 = vunpack.c.h.b16 %v2064
        %v2283 = vunpack.c.l.b16 %v2065
        %v2284 = vunpack.c.h.b16 %v2065
        %v2285 = vunpack.c.l.b16 %v2066
        %v2286 = vunpack.c.h.b16 %v2066
        %v2287 = vunpack.c.l.b16 %v2067
        %v2288 = vunpack.c.h.b16 %v2067
        %v2289 = vunpack.c.l.b16 %v2068
        %v2290 = vunpack.c.h.b16 %v2068
        %v2291 = vunpack.c.l.b16 %v2069
        %v2292 = vunpack.c.h.b16 %v2069
        %v2293 = vunpack.c.l.b16 %v2070
        %v2294 = vunpack.c.h.b16 %v2070
        %v2295 = vunpack.c.l.b16 %v2071
        %v2296 = vunpack.c.h.b16 %v2071
        %v2297 = vunpack.c.l.b16 %v2072
        %v2298 = vunpack.c.h.b16 %v2072
        %v2299 = vunpack.c.l.b16 %v2073
        %v2300 = vunpack.c.h.b16 %v2073
        %v2301 = vunpack.c.l.b16 %v2074
        %v2302 = vunpack.c.h.b16 %v2074
        %v2303 = vunpack.c.l.b16 %v2075
        %v2304 = vunpack.c.h.b16 %v2075
        %v2305 = vunpack.c.l.b16 %v2076
        %v2306 = vunpack.c.h.b16 %v2076
        %v2307 = vunpack.c.l.b16 %v2077
        %v2308 = vunpack.c.h.b16 %v2077
        %v2309 = vunpack.c.l.b16 %v2078
        %v2310 = vunpack.c.h.b16 %v2078
        %v2311 = vunpack.c.l.b16 %v2079
        %v2312 = vunpack.c.h.b16 %v2079
        %v2313 = vunpack.c.l.b16 %v2080
        %v2314 = vunpack.c.h.b16 %v2080
        %v2315 = vpack.c.b16 %v2195, %v2187
        %v2316 = vpack.c.b16 %v2196, %v2188
        %v2317 = vpack.c.b16 %v2197, %v2189
        %v2318 = vpack.c.b16 %v2198, %v2190
        %v2319 = vpack.c.b16 %v2199, %v2191
        %v2320 = vpack.c.b16 %v2200, %v2192
        %v2321 = vpack.c.b16 %v2201, %v2193
        %v2322 = vpack.c.b16 %v2202, %v2194
        %v2323 = vpack.c.b16 %v2211, %v2203
        %v2324 = vpack.c.b16 %v2212, %v2204
        %v2325 = vpack.c.b16 %v2213, %v2205
        %v2326 = vpack.c.b16 %v2214, %v2206
        %v2327 = vpack.c.b16 %v2215, %v2207
        %v2328 = vpack.c.b16 %v2216, %v2208
        %v2329 = vpack.c.b16 %v2217, %v2209
        %v2330 = vpack.c.b16 %v2218, %v2210
        %v2331 = vpack.c.b16 %v2227, %v2219
        %v2332 = vpack.c.b16 %v2228, %v2220
        %v2333 = vpack.c.b16 %v2229, %v2221
        %v2334 = vpack.c.b16 %v2230, %v2222
        %v2335 = vpack.c.b16 %v2231, %v2223
        %v2336 = vpack.c.b16 %v2232, %v2224
        %v2337 = vpack.c.b16 %v2233, %v2225
        %v2338 = vpack.c.b16 %v2234, %v2226
        %v2339 = vpack.c.b16 %v2243, %v2235
        %v2340 = vpack.c.b16 %v2244, %v2236
        %v2341 = vpack.c.b16 %v2245, %v2237
        %v2342 = vpack.c.b16 %v2246, %v2238
        %v2343 = vpack.c.b16 %v2247, %v2239
        %v2344 = vpack.c.b16 %v2248, %v2240
        %v2345 = vpack.c.b16 %v2249, %v2241
        %v2346 = vpack.c.b16 %v2250, %v2242
        %v2347 = vpack.c.b16 %v2259, %v2251
        %v2348 = vpack.c.b16 %v2260, %v2252
        %v2349 = vpack.c.b16 %v2261, %v2253
        %v2350 = vpack.c.b16 %v2262, %v2254
        %v2351 = vpack.c.b16 %v2263, %v2255
        %v2352 = vpack.c.b16 %v2264, %v2256
        %v2353 = vpack.c.b16 %v2265, %v2257
        %v2354 = vpack.c.b16 %v2266, %v2258
        %v2355 = vpack.c.b16 %v2275, %v2267
        %v2356 = vpack.c.b16 %v2276, %v2268
        %v2357 = vpack.c.b16 %v2277, %v2269
        %v2358 = vpack.c.b16 %v2278, %v2270
        %v2359 = vpack.c.b16 %v2279, %v2271
        %v2360 = vpack.c.b16 %v2280, %v2272
        %v2361 = vpack.c.b16 %v2281, %v2273
        %v2362 = vpack.c.b16 %v2282, %v2274
        %v2363 = vpack.c.b16 %v2291, %v2283
        %v2364 = vpack.c.b16 %v2292, %v2284
        %v2365 = vpack.c.b16 %v2293, %v2285
        %v2366 = vpack.c.b16 %v2294, %v2286
        %v2367 = vpack.c.b16 %v2295, %v2287
        %v2368 = vpack.c.b16 %v2296, %v2288
        %v2369 = vpack.c.b16 %v2297, %v2289
        %v2370 = vpack.c.b16 %v2298, %v2290
        %v2371 = vpack.c.b16 %v2307, %v2299
        %v2372 = vpack.c.b16 %v2308, %v2300
        %v2373 = vpack.c.b16 %v2309, %v2301
        %v2374 = vpack.c.b16 %v2310, %v2302
        %v2375 = vpack.c.b16 %v2311, %v2303
        %v2376 = vpack.c.b16 %v2312, %v2304
        %v2377 = vpack.c.b16 %v2313, %v2305
        %v2378 = vpack.c.b16 %v2314, %v2306
        %2443 = vmatprep.subr.bf16.mxu0 %v2316
        %2444 = vmatpush1.bf16.msra.mxu0 %v2315
        %2445 = vmatprep.subr.bf16.mxu0 %v2324
        %2446 = vmatpush1.bf16.msra.mxu0 %v2323
        %2447 = vmatprep.subr.bf16.mxu0 %v2332
        %2448 = vmatpush1.bf16.msra.mxu0 %v2331
        %2449 = vmatprep.subr.bf16.mxu0 %v2340
        %2450 = vmatpush1.bf16.msra.mxu0 %v2339
        %2451 = vmatprep.subr.bf16.mxu0 %v2348
        %2452 = vmatpush1.bf16.msra.mxu0 %v2347
        %2453 = vmatprep.subr.bf16.mxu0 %v2356
        %2454 = vmatpush1.bf16.msra.mxu0 %v2355
        %2455 = vmatprep.subr.bf16.mxu0 %v2364
        %2456 = vmatpush1.bf16.msra.mxu0 %v2363
        %2457 = vmatprep.subr.bf16.mxu0 %v2372
        %2458 = vmatpush1.bf16.msra.mxu0 %v2371
        %2459 = vmatprep.subr.bf16.mxu0 0
        %2460 = vmatpush1.bf16.msra.mxu0 0
        %2461 = vmatprep.subr.bf16.mxu0 0
        %2462 = vmatpush1.bf16.msra.mxu0 0
        %2463 = vmatprep.subr.bf16.mxu0 0
        %2464 = vmatpush1.bf16.msra.mxu0 0
        %2465 = vmatprep.subr.bf16.mxu0 0
        %2466 = vmatpush1.bf16.msra.mxu0 0
        %2467 = vmatprep.subr.bf16.mxu0 0
        %2468 = vmatpush1.bf16.msra.mxu0 0
        %2469 = vmatprep.subr.bf16.mxu0 0
        %2470 = vmatpush1.bf16.msra.mxu0 0
        %2471 = vmatprep.subr.bf16.mxu0 0
        %2472 = vmatpush1.bf16.msra.mxu0 0
        %2473 = vmatprep.subr.bf16.mxu0 0
        %2474 = vmatpush1.bf16.msra.mxu0 0
        %2475 = vmatprep.mubr.bf16.mxu0 0
        %2476 = vmatmul.mubr.bf16.gmra.mrb[0].mxu0 %v2016
        %v2477 = vpop.f32.mrb[0].mxu0
        %v2478 = vadd.f32 %v2086, %v2477
        %v2479 = vpop.f32.mrb[0].mxu0
        %v2480 = vadd.f32 %v2090, %v2479
        %v2481 = vpop.f32.mrb[0].mxu0
        %v2482 = vpop.f32.mrb[0].mxu0
        %2483 = vdwg.mxu0
        %2484 = vmatprep.subr.bf16.mxu0 %v2318
        %2485 = vmatpush1.bf16.msra.mxu0 %v2317
        %2486 = vmatprep.subr.bf16.mxu0 %v2326
        %2487 = vmatpush1.bf16.msra.mxu0 %v2325
        %2488 = vmatprep.subr.bf16.mxu0 %v2334
        %2489 = vmatpush1.bf16.msra.mxu0 %v2333
        %2490 = vmatprep.subr.bf16.mxu0 %v2342
        %2491 = vmatpush1.bf16.msra.mxu0 %v2341
        %2492 = vmatprep.subr.bf16.mxu0 %v2350
        %2493 = vmatpush1.bf16.msra.mxu0 %v2349
        %2494 = vmatprep.subr.bf16.mxu0 %v2358
        %2495 = vmatpush1.bf16.msra.mxu0 %v2357
        %2496 = vmatprep.subr.bf16.mxu0 %v2366
        %2497 = vmatpush1.bf16.msra.mxu0 %v2365
        %2498 = vmatprep.subr.bf16.mxu0 %v2374
        %2499 = vmatpush1.bf16.msra.mxu0 %v2373
        %2500 = vmatprep.subr.bf16.mxu0 0
        %2501 = vmatpush1.bf16.msra.mxu0 0
        %2502 = vmatprep.subr.bf16.mxu0 0
        %2503 = vmatpush1.bf16.msra.mxu0 0
        %2504 = vmatprep.subr.bf16.mxu0 0
        %2505 = vmatpush1.bf16.msra.mxu0 0
        %2506 = vmatprep.subr.bf16.mxu0 0
        %2507 = vmatpush1.bf16.msra.mxu0 0
        %2508 = vmatprep.subr.bf16.mxu0 0
        %2509 = vmatpush1.bf16.msra.mxu0 0
        %2510 = vmatprep.subr.bf16.mxu0 0
        %2511 = vmatpush1.bf16.msra.mxu0 0
        %2512 = vmatprep.subr.bf16.mxu0 0
        %2513 = vmatpush1.bf16.msra.mxu0 0
        %2514 = vmatprep.subr.bf16.mxu0 0
        %2515 = vmatpush1.bf16.msra.mxu0 0
        %2516 = vmatprep.mubr.bf16.mxu0 0
        %2517 = vmatmul.mubr.bf16.gmra.mrb[0].mxu0 %v2016
        %v2518 = vpop.f32.mrb[0].mxu0
        %v2519 = vadd.f32 %v2094, %v2518
        %v2520 = vpop.f32.mrb[0].mxu0
        %v2521 = vadd.f32 %v2098, %v2520
        %v2522 = vpop.f32.mrb[0].mxu0
        %v2523 = vpop.f32.mrb[0].mxu0
        %2524 = vdwg.mxu0
        %2525 = vmatprep.subr.bf16.mxu0 %v2320
        %2526 = vmatpush1.bf16.msra.mxu0 %v2319
        %2527 = vmatprep.subr.bf16.mxu0 %v2328
        %2528 = vmatpush1.bf16.msra.mxu0 %v2327
        %2529 = vmatprep.subr.bf16.mxu0 %v2336
        %2530 = vmatpush1.bf16.msra.mxu0 %v2335
        %2531 = vmatprep.subr.bf16.mxu0 %v2344
        %2532 = vmatpush1.bf16.msra.mxu0 %v2343
        %2533 = vmatprep.subr.bf16.mxu0 %v2352
        %2534 = vmatpush1.bf16.msra.mxu0 %v2351
        %2535 = vmatprep.subr.bf16.mxu0 %v2360
        %2536 = vmatpush1.bf16.msra.mxu0 %v2359
        %2537 = vmatprep.subr.bf16.mxu0 %v2368
        %2538 = vmatpush1.bf16.msra.mxu0 %v2367
        %2539 = vmatprep.subr.bf16.mxu0 %v2376
        %2540 = vmatpush1.bf16.msra.mxu0 %v2375
        %2541 = vmatprep.subr.bf16.mxu0 0
        %2542 = vmatpush1.bf16.msra.mxu0 0
        %2543 = vmatprep.subr.bf16.mxu0 0
        %2544 = vmatpush1.bf16.msra.mxu0 0
        %2545 = vmatprep.subr.bf16.mxu0 0
        %2546 = vmatpush1.bf16.msra.mxu0 0
        %2547 = vmatprep.subr.bf16.mxu0 0
        %2548 = vmatpush1.bf16.msra.mxu0 0
        %2549 = vmatprep.subr.bf16.mxu0 0
        %2550 = vmatpush1.bf16.msra.mxu0 0
        %2551 = vmatprep.subr.bf16.mxu0 0
        %2552 = vmatpush1.bf16.msra.mxu0 0
        %2553 = vmatprep.subr.bf16.mxu0 0
        %2554 = vmatpush1.bf16.msra.mxu0 0
        %2555 = vmatprep.subr.bf16.mxu0 0
        %2556 = vmatpush1.bf16.msra.mxu0 0
        %2557 = vmatprep.mubr.bf16.mxu0 0
        %2558 = vmatmul.mubr.bf16.gmra.mrb[0].mxu0 %v2016
        %v2559 = vpop.f32.mrb[0].mxu0
        %v2560 = vadd.f32 %v2102, %v2559
        %v2561 = vpop.f32.mrb[0].mxu0
        %v2562 = vadd.f32 %v2106, %v2561
        %v2563 = vpop.f32.mrb[0].mxu0
        %v2564 = vpop.f32.mrb[0].mxu0
        %2565 = vdwg.mxu0
        %2566 = vmatprep.subr.bf16.mxu0 %v2322
        %2567 = vmatpush1.bf16.msra.mxu0 %v2321
        %2568 = vmatprep.subr.bf16.mxu0 %v2330
        %2569 = vmatpush1.bf16.msra.mxu0 %v2329
        %2570 = vmatprep.subr.bf16.mxu0 %v2338
        %2571 = vmatpush1.bf16.msra.mxu0 %v2337
        %2572 = vmatprep.subr.bf16.mxu0 %v2346
        %2573 = vmatpush1.bf16.msra.mxu0 %v2345
        %2574 = vmatprep.subr.bf16.mxu0 %v2354
        %2575 = vmatpush1.bf16.msra.mxu0 %v2353
        %2576 = vmatprep.subr.bf16.mxu0 %v2362
        %2577 = vmatpush1.bf16.msra.mxu0 %v2361
        %2578 = vmatprep.subr.bf16.mxu0 %v2370
        %2579 = vmatpush1.bf16.msra.mxu0 %v2369
        %2580 = vmatprep.subr.bf16.mxu0 %v2378
        %2581 = vmatpush1.bf16.msra.mxu0 %v2377
        %2582 = vmatprep.subr.bf16.mxu0 0
        %2583 = vmatpush1.bf16.msra.mxu0 0
        %2584 = vmatprep.subr.bf16.mxu0 0
        %2585 = vmatpush1.bf16.msra.mxu0 0
        %2586 = vmatprep.subr.bf16.mxu0 0
        %2587 = vmatpush1.bf16.msra.mxu0 0
        %2588 = vmatprep.subr.bf16.mxu0 0
        %2589 = vmatpush1.bf16.msra.mxu0 0
        %2590 = vmatprep.subr.bf16.mxu0 0
        %2591 = vmatpush1.bf16.msra.mxu0 0
        %2592 = vmatprep.subr.bf16.mxu0 0
        %2593 = vmatpush1.bf16.msra.mxu0 0
        %2594 = vmatprep.subr.bf16.mxu0 0
        %2595 = vmatpush1.bf16.msra.mxu0 0
        %2596 = vmatprep.subr.bf16.mxu0 0
        %2597 = vmatpush1.bf16.msra.mxu0 0
        %2598 = vmatprep.mubr.bf16.mxu0 0
        %2599 = vmatmul.mubr.bf16.gmra.mrb[0].mxu0 %v2016
        %v2600 = vpop.f32.mrb[0].mxu0
        %v2601 = vadd.f32 %v2110, %v2600
        %v2602 = vpop.f32.mrb[0].mxu0
        %v2603 = vadd.f32 %v2114, %v2602
        %v2604 = vpop.f32.mrb[0].mxu0
        %v2605 = vpop.f32.mrb[0].mxu0
        %2606 = vdwg.mxu0
        %v2607 = vxor.u32 %v2478, 2147483648
        %v2608 = vxor.u32 %v2480, 2147483648
        %v2609 = vxor.u32 %v2519, 2147483648
        %v2610 = vxor.u32 %v2521, 2147483648
        %v2611 = vxor.u32 %v2560, 2147483648
        %v2612 = vxor.u32 %v2562, 2147483648
        %v2613 = vxor.u32 %v2601, 2147483648
        %v2614 = vxor.u32 %v2603, 2147483648
        %v2615 = vmul.f32 %v2607, 1.442695
        %v2616 = vpow.pop %v2615
        %v2617 = vmul.f32 %v2608, 1.442695
        %v2618 = vpow.pop %v2617
        %v2619 = vmul.f32 %v2609, 1.442695
        %v2620 = vpow.pop %v2619
        %v2621 = vmul.f32 %v2610, 1.442695
        %v2622 = vpow.pop %v2621
        %v2623 = vmul.f32 %v2611, 1.442695
        %v2624 = vpow.pop %v2623
        %v2625 = vmul.f32 %v2612, 1.442695
        %v2626 = vpow.pop %v2625
        %v2627 = vmul.f32 %v2613, 1.442695
        %v2628 = vpow.pop %v2627
        %v2629 = vmul.f32 %v2614, 1.442695
        %v2630 = vpow.pop %v2629
        %v2631 = vadd.f32 %v2616, 1.0
        %v2632 = vadd.f32 %v2618, 1.0
        %v2633 = vadd.f32 %v2620, 1.0
        %v2634 = vadd.f32 %v2622, 1.0
        %v2635 = vadd.f32 %v2624, 1.0
        %v2636 = vadd.f32 %v2626, 1.0
        %v2637 = vadd.f32 %v2628, 1.0
        %v2638 = vadd.f32 %v2630, 1.0
        %v2639 = vrcp.pop %v2631
        %v2640 = vmul.f32 1.0, %v2639
        %v2641 = vrcp.pop %v2632
        %v2642 = vmul.f32 1.0, %v2641
        %v2643 = vrcp.pop %v2633
        %v2644 = vmul.f32 1.0, %v2643
        %v2645 = vrcp.pop %v2634
        %v2646 = vmul.f32 1.0, %v2645
        %v2647 = vrcp.pop %v2635
        %v2648 = vmul.f32 1.0, %v2647
        %v2649 = vrcp.pop %v2636
        %v2650 = vmul.f32 1.0, %v2649
        %v2651 = vrcp.pop %v2637
        %v2652 = vmul.f32 1.0, %v2651
        %v2653 = vrcp.pop %v2638
        %v2654 = vmul.f32 1.0, %v2653
        %2655 = vst [vmem:[%s752] sm:$0xff] %v2640
        %2656 = vst [vmem:[%s752 + $0x8] sm:$0xff] %v2642
        %2657 = vst [vmem:[%s752 + $0x10] sm:$0xff] %v2644
        %2658 = vst [vmem:[%s752 + $0x18] sm:$0xff] %v2646
        %2659 = vst [vmem:[%s752 + $0x20] sm:$0xff] %v2648
        %2660 = vst [vmem:[%s752 + $0x28] sm:$0xff] %v2650
        %2661 = vst [vmem:[%s752 + $0x30] sm:$0xff] %v2652
        %2662 = vst [vmem:[%s752 + $0x38] sm:$0xff] %v2654
        %v2663 = vpack.c.bf16 %v1902, %v1902
        %v2664 = vld [vmem:[%s16] sm:$0xf]
        %v2665 = vld [vmem:[%s16 + $0x4] sm:$0xf]
        %v2666 = vld [vmem:[%s16 + $0x8] sm:$0xf]
        %v2667 = vld [vmem:[%s16 + $0xc] sm:$0xf]
        %v2668 = vld [vmem:[%s16 + $0x10] sm:$0xf]
        %v2669 = vld [vmem:[%s16 + $0x14] sm:$0xf]
        %v2670 = vld [vmem:[%s16 + $0x18] sm:$0xf]
        %v2671 = vld [vmem:[%s16 + $0x1c] sm:$0xf]
        %v2672 = vld [vmem:[%s16 + $0x20] sm:$0xf]
        %v2673 = vld [vmem:[%s16 + $0x24] sm:$0xf]
        %v2674 = vld [vmem:[%s16 + $0x28] sm:$0xf]
        %v2675 = vld [vmem:[%s16 + $0x2c] sm:$0xf]
        %v2676 = vld [vmem:[%s16 + $0x30] sm:$0xf]
        %v2677 = vld [vmem:[%s16 + $0x34] sm:$0xf]
        %v2678 = vld [vmem:[%s16 + $0x38] sm:$0xf]
        %v2679 = vld [vmem:[%s16 + $0x3c] sm:$0xf]
        %v2680 = vld [vmem:[%s17] sm:$0x1]
        %v2682 = vlaneseq
        %v2683 = vshrl.u32 %v2682, 7
        %v2684 = vsub.s32 0, %v2683
        %v2685 = vrot.slane %v2680, %v2684
        %v2703 = vunpack.c.l.b16 %v2664
        %v2704 = vunpack.c.l.b16 %v2665
        %v2705 = vunpack.c.l.b16 %v2666
        %v2706 = vunpack.c.l.b16 %v2667
        %v2707 = vunpack.c.l.b16 %v2668
        %v2708 = vunpack.c.l.b16 %v2669
        %v2709 = vunpack.c.l.b16 %v2670
        %v2710 = vunpack.c.l.b16 %v2671
        %v2711 = vunpack.c.l.b16 %v2672
        %v2712 = vunpack.c.l.b16 %v2673
        %v2713 = vunpack.c.l.b16 %v2674
        %v2714 = vunpack.c.l.b16 %v2675
        %v2715 = vunpack.c.l.b16 %v2676
        %v2716 = vunpack.c.l.b16 %v2677
        %v2717 = vunpack.c.l.b16 %v2678
        %v2718 = vunpack.c.l.b16 %v2679
        %v2719 = vpack.c.b16 %v2704, %v2703
        %v2720 = vpack.c.b16 %v2706, %v2705
        %v2721 = vpack.c.b16 %v2708, %v2707
        %v2722 = vpack.c.b16 %v2710, %v2709
        %v2723 = vpack.c.b16 %v2712, %v2711
        %v2724 = vpack.c.b16 %v2714, %v2713
        %v2725 = vpack.c.b16 %v2716, %v2715
        %v2726 = vpack.c.b16 %v2718, %v2717
        %2735 = vmatprep.subr.bf16.mxu0 0
        %2736 = vmatpush1.bf16.msra.mxu0 %v2719
        %2737 = vmatprep.subr.bf16.mxu0 0
        %2738 = vmatpush1.bf16.msra.mxu0 %v2720
        %2739 = vmatprep.subr.bf16.mxu0 0
        %2740 = vmatpush1.bf16.msra.mxu0 %v2721
        %2741 = vmatprep.subr.bf16.mxu0 0
        %2742 = vmatpush1.bf16.msra.mxu0 %v2722
        %2743 = vmatprep.subr.bf16.mxu0 0
        %2744 = vmatpush1.bf16.msra.mxu0 %v2723
        %2745 = vmatprep.subr.bf16.mxu0 0
        %2746 = vmatpush1.bf16.msra.mxu0 %v2724
        %2747 = vmatprep.subr.bf16.mxu0 0
        %2748 = vmatpush1.bf16.msra.mxu0 %v2725
        %2749 = vmatprep.subr.bf16.mxu0 0
        %2750 = vmatpush1.bf16.msra.mxu0 %v2726
        %2751 = vmatprep.subr.bf16.mxu0 0
        %2752 = vmatpush1.bf16.msra.mxu0 0
        %2753 = vmatprep.subr.bf16.mxu0 0
        %2754 = vmatpush1.bf16.msra.mxu0 0
        %2755 = vmatprep.subr.bf16.mxu0 0
        %2756 = vmatpush1.bf16.msra.mxu0 0
        %2757 = vmatprep.subr.bf16.mxu0 0
        %2758 = vmatpush1.bf16.msra.mxu0 0
        %2759 = vmatprep.subr.bf16.mxu0 0
        %2760 = vmatpush1.bf16.msra.mxu0 0
        %2761 = vmatprep.subr.bf16.mxu0 0
        %2762 = vmatpush1.bf16.msra.mxu0 0
        %2763 = vmatprep.subr.bf16.mxu0 0
        %2764 = vmatpush1.bf16.msra.mxu0 0
        %2765 = vmatprep.subr.bf16.mxu0 0
        %2766 = vmatpush1.bf16.msra.mxu0 0
        %2767 = vmatprep.mubr.bf16.mxu0 0
        %2768 = vmatmul.mubr.bf16.gmra.mrb[0].mxu0 %v2663
        %v2769 = vpop.f32.mrb[0].mxu0
        %v2770 = vadd.f32 %v2685, %v2769
        %v2771 = vpop.f32.mrb[0].mxu0
        %v2772 = vpop.f32.mrb[0].mxu0
        %v2773 = vpop.f32.mrb[0].mxu0
        %2774 = vdwg.mxu0
        %v2775 = vmax.f32 %v2770, 0.0
        %v2776 = vpack.c.bf16 %v2775, %v2775
        %v2777 = vld [vmem:[%s18] sm:$0xf]
        %v2778 = vld [vmem:[%s18 + $0x4] sm:$0xf]
        %v2779 = vld [vmem:[%s18 + $0x8] sm:$0xf]
        %v2780 = vld [vmem:[%s18 + $0xc] sm:$0xf]
        %v2781 = vld [vmem:[%s18 + $0x10] sm:$0xf]
        %v2782 = vld [vmem:[%s18 + $0x14] sm:$0xf]
        %v2783 = vld [vmem:[%s18 + $0x18] sm:$0xf]
        %v2784 = vld [vmem:[%s18 + $0x1c] sm:$0xf]
        %v2785 = vld [vmem:[%s18 + $0x20] sm:$0xf]
        %v2786 = vld [vmem:[%s18 + $0x24] sm:$0xf]
        %v2787 = vld [vmem:[%s18 + $0x28] sm:$0xf]
        %v2788 = vld [vmem:[%s18 + $0x2c] sm:$0xf]
        %v2789 = vld [vmem:[%s18 + $0x30] sm:$0xf]
        %v2790 = vld [vmem:[%s18 + $0x34] sm:$0xf]
        %v2791 = vld [vmem:[%s18 + $0x38] sm:$0xf]
        %v2792 = vld [vmem:[%s18 + $0x3c] sm:$0xf]
        %v2793 = vld [vmem:[%s19] sm:$0x1]
        %v2795 = vlaneseq
        %v2796 = vshrl.u32 %v2795, 7
        %v2797 = vsub.s32 0, %v2796
        %v2798 = vrot.slane %v2793, %v2797
        %v2816 = vunpack.c.l.b16 %v2777
        %v2817 = vunpack.c.l.b16 %v2778
        %v2818 = vunpack.c.l.b16 %v2779
        %v2819 = vunpack.c.l.b16 %v2780
        %v2820 = vunpack.c.l.b16 %v2781
        %v2821 = vunpack.c.l.b16 %v2782
        %v2822 = vunpack.c.l.b16 %v2783
        %v2823 = vunpack.c.l.b16 %v2784
        %v2824 = vunpack.c.l.b16 %v2785
        %v2825 = vunpack.c.l.b16 %v2786
        %v2826 = vunpack.c.l.b16 %v2787
        %v2827 = vunpack.c.l.b16 %v2788
        %v2828 = vunpack.c.l.b16 %v2789
        %v2829 = vunpack.c.l.b16 %v2790
        %v2830 = vunpack.c.l.b16 %v2791
        %v2831 = vunpack.c.l.b16 %v2792
        %v2832 = vpack.c.b16 %v2817, %v2816
        %v2833 = vpack.c.b16 %v2819, %v2818
        %v2834 = vpack.c.b16 %v2821, %v2820
        %v2835 = vpack.c.b16 %v2823, %v2822
        %v2836 = vpack.c.b16 %v2825, %v2824
        %v2837 = vpack.c.b16 %v2827, %v2826
        %v2838 = vpack.c.b16 %v2829, %v2828
        %v2839 = vpack.c.b16 %v2831, %v2830
        %2848 = vmatprep.subr.bf16.mxu0 0
        %2849 = vmatpush1.bf16.msra.mxu0 %v2832
        %2850 = vmatprep.subr.bf16.mxu0 0
        %2851 = vmatpush1.bf16.msra.mxu0 %v2833
        %2852 = vmatprep.subr.bf16.mxu0 0
        %2853 = vmatpush1.bf16.msra.mxu0 %v2834
        %2854 = vmatprep.subr.bf16.mxu0 0
        %2855 = vmatpush1.bf16.msra.mxu0 %v2835
        %2856 = vmatprep.subr.bf16.mxu0 0
        %2857 = vmatpush1.bf16.msra.mxu0 %v2836
        %2858 = vmatprep.subr.bf16.mxu0 0
        %2859 = vmatpush1.bf16.msra.mxu0 %v2837
        %2860 = vmatprep.subr.bf16.mxu0 0
        %2861 = vmatpush1.bf16.msra.mxu0 %v2838
        %2862 = vmatprep.subr.bf16.mxu0 0
        %2863 = vmatpush1.bf16.msra.mxu0 %v2839
        %2864 = vmatprep.subr.bf16.mxu0 0
        %2865 = vmatpush1.bf16.msra.mxu0 0
        %2866 = vmatprep.subr.bf16.mxu0 0
        %2867 = vmatpush1.bf16.msra.mxu0 0
        %2868 = vmatprep.subr.bf16.mxu0 0
        %2869 = vmatpush1.bf16.msra.mxu0 0
        %2870 = vmatprep.subr.bf16.mxu0 0
        %2871 = vmatpush1.bf16.msra.mxu0 0
        %2872 = vmatprep.subr.bf16.mxu0 0
        %2873 = vmatpush1.bf16.msra.mxu0 0
        %2874 = vmatprep.subr.bf16.mxu0 0
        %2875 = vmatpush1.bf16.msra.mxu0 0
        %2876 = vmatprep.subr.bf16.mxu0 0
        %2877 = vmatpush1.bf16.msra.mxu0 0
        %2878 = vmatprep.subr.bf16.mxu0 0
        %2879 = vmatpush1.bf16.msra.mxu0 0
        %2880 = vmatprep.mubr.bf16.mxu0 0
        %2881 = vmatmul.mubr.bf16.gmra.mrb[0].mxu0 %v2776
        %v2882 = vpop.f32.mrb[0].mxu0
        %v2883 = vadd.f32 %v2798, %v2882
        %v2884 = vpop.f32.mrb[0].mxu0
        %v2885 = vpop.f32.mrb[0].mxu0
        %v2886 = vpop.f32.mrb[0].mxu0
        %2887 = vdwg.mxu0
        %v2888 = vxor.u32 %v2883, 2147483648
        %v2889 = vmul.f32 %v2888, 1.442695
        %v2890 = vpow.pop %v2889
        %v2891 = vadd.f32 %v2890, 1.0
        %v2892 = vrcp.pop %v2891
        %v2893 = vmul.f32 1.0, %v2892
        %2894 = vst [vmem:[%s723] sm:$0xff] %v2893
        %p2895 = scmp.lt.s32.totalorder %s37, 1
        %s2896 = scalar_select %p2895, %s37, 1
        %s2897 = smul.addr %s2896, 8
        %s2898 = smul.addr %s2897, 8
        %s2899 = scalar_lea.vmem %s20, %s2898
        %s2900 = sand.u32 %s511, 1
        %s2901 = scalar_lea.sflag [#allocation3], %s2900
        %s2902 = sand.u32 %s511, 1
        %s2903 = smul.addr %s2902, 8
        %s2904 = scalar_lea.vmem [#allocation2], %s2903
        %p2905 = scmp.lt.s32.totalorder %s37, 1
        %s2906 = scalar_select %p2905, %s37, 1
        %s2907 = smul.addr %s2906, 2
        %s2908 = smul.addr %s2907, 8
        %s2909 = scalar_lea.vmem %s22, %s2908
        // Predicated region
        $region101: #{multivae_forward.1} parent=99 // pred_check
          %p2910 = pneg %p495
        $region102: #{multivae_forward.1} parent=99 // pred_check_branch
          %2912 = sbr.rel (%p2910) target = $region104
        $region103: #{multivae_forward.1} parent=99 // pred_region
          _
        $region104: #{multivae_forward.1} parent=99 // pred_fallthru
          _
        // Predicated region
        $region105: #{multivae_forward.1} parent=99 // pred_check
          %p2913 = pneg %p521
        $region106: #{multivae_forward.1} parent=99 // pred_check_branch
          %2915 = sbr.rel (%p2913) target = $region108
        $region107: #{multivae_forward.1} parent=99 // pred_region
          %s2917 = ssub.s32 128, 128
          %2918 = vsyncadd %s2901, %s2917
          %s2919 = smul.addr %s37, 128
          %s2920 = scalar_lea.hbm %s21, %s2919
          %s2922 = sshll.u32 %s2904, 4
          %s2923 = int_to_ptr.vmem [resolvable:$true] %s2922
          %2925 = dma.vmem_to_hbm [thread:$0]  %s2923, 128, %s2920, %s2901
        $region108: #{multivae_forward.1} parent=99 // pred_fallthru
          _
        // Predicated region
        $region109: #{multivae_forward.1} parent=99 // pred_check
          %p2926 = pneg %p547
        $region110: #{multivae_forward.1} parent=99 // pred_check_branch
          %2928 = sbr.rel (%p2926) target = $region112
        $region111: #{multivae_forward.1} parent=99 // pred_region
          _
        $region112: #{multivae_forward.1} parent=99 // pred_fallthru
          _
      $region100: #{multivae_forward.1} parent=5 // pred_fallthru
        _
      %p2929 = scmp.le.s32.totalorder 2, %s32
      // Predicated region
      $region113: #{multivae_forward.1} parent=5 // pred_check
        %p2930 = pneg %p2929
      $region114: #{multivae_forward.1} parent=5 // pred_check_branch
        %2932 = sbr.rel (%p2930) target = $region116
      $region115: #{multivae_forward.1} parent=5 // pred_region
        %s2933 = ssub.s32 %s32, 2
        // Predicated region
        $region117: #{multivae_forward.1} parent=115 // pred_check
          %p2934 = pneg %p501
        $region118: #{multivae_forward.1} parent=115 // pred_check_branch
          %2936 = sbr.rel (%p2934) target = $region120
        $region119: #{multivae_forward.1} parent=115 // pred_region
          %p2937 = scmp.lt.s32.totalorder %s38, 1
          %s2938 = scalar_select %p2937, %s38, 1
          %s2939 = smul.addr %s2938, 8
          %s2940 = smul.addr %s2939, 8
          %s2941 = scalar_lea.vmem %s20, %s2940
        $region120: #{multivae_forward.1} parent=115 // pred_fallthru
          _
        // Predicated region
        $region121: #{multivae_forward.1} parent=115 // pred_check
          %p2942 = pneg %p527
        $region122: #{multivae_forward.1} parent=115 // pred_check_branch
          %2944 = sbr.rel (%p2942) target = $region124
        $region123: #{multivae_forward.1} parent=115 // pred_region
          %s2945 = sand.u32 %s512, 1
          %s2946 = scalar_lea.sflag [#allocation3], %s2945
          %s2947 = sand.u32 %s512, 1
          %s2948 = smul.addr %s2947, 8
          %s2949 = scalar_lea.vmem [#allocation2], %s2948
          %2950 = dma.done %s2946, 128
        $region124: #{multivae_forward.1} parent=115 // pred_fallthru
          _
        // Predicated region
        $region125: #{multivae_forward.1} parent=115 // pred_check
          %p2951 = pneg %p553
        $region126: #{multivae_forward.1} parent=115 // pred_check_branch
          %2953 = sbr.rel (%p2951) target = $region128
        $region127: #{multivae_forward.1} parent=115 // pred_region
          %p2954 = scmp.lt.s32.totalorder %s38, 1
          %s2955 = scalar_select %p2954, %s38, 1
          %s2956 = smul.addr %s2955, 2
          %s2957 = smul.addr %s2956, 8
          %s2958 = scalar_lea.vmem %s22, %s2957
        $region128: #{multivae_forward.1} parent=115 // pred_fallthru
          _
      $region116: #{multivae_forward.1} parent=5 // pred_fallthru
        _
    $region6: #{multivae_forward.1} parent=1 // loop_footer
      %s36 = sadd.s32 1, %s32
    $region7: #{multivae_forward.1} parent=1 // loop_footer_branch
      %31 = sbr.rel target = $region3
    $region8: #{multivae_forward.1} parent=1 // loop_exit
      _
    %2959 = vsyncpa [#allocation3], 1
    %s2960 = scalar_lea.sflag [#allocation3], 1
    %2961 = vsyncpa %s2960, 1

</llo_original>
